<compile_context>
chip_gen: v7x
topology: tpu7x:2x2x1
jax: 0.10.0
libtpu: 0.0.40
codegen_flags: <defaults>
</compile_context>

<pallas_src>
import functools
import math

import jax
import jax.numpy as jnp
from jax.experimental import pallas as pl
from jax.experimental.pallas import tpu as pltpu

LN_EPS = 1e-5  # torch nn.LayerNorm default


def _layernorm(x, gamma, beta):
    mu = jnp.mean(x, axis=-1, keepdims=True)
    var = jnp.mean((x - mu) ** 2, axis=-1, keepdims=True)
    return (x - mu) * jax.lax.rsqrt(var + LN_EPS) * gamma + beta


def block_kernel(x_ref, ln1g_ref, ln1b_ref, wqkv_ref, wp_ref, bp_ref,
                 ln2g_ref, ln2b_ref, w1_ref, b1_ref, w2_ref, b2_ref,
                 o_ref, qkv_ref, *, num_heads):
    Bb, T, C = x_ref.shape
    H = num_heads
    Dh = C // H
    N = Bb * T

    x = x_ref[...].reshape(N, C)                       # (N, C) f32 rows of this block

    # ---- LayerNorm 1 + fused QKV projection (one wide bf16 MXU matmul) ----
    # Result is staged in a bf16 VMEM scratch (halves residency, bounds live ranges).
    h1 = _layernorm(x, ln1g_ref[...], ln1b_ref[...])
    qkv_ref[...] = jnp.dot(h1.astype(jnp.bfloat16), wqkv_ref[...],
                           preferred_element_type=jnp.float32).astype(jnp.bfloat16)

    # ---- head-batched causal self-attention ----
    # One transpose to head-major, then two einsums batched over Bb*H heads.
    qkv = qkv_ref[...].reshape(Bb, T, 3 * H, Dh)       # minor-split reshape only
    qkv = jnp.swapaxes(qkv, 1, 2)                      # (Bb, 3H, T, Dh) bf16
    q = qkv[:, :H].reshape(Bb * H, T, Dh)
    k = qkv[:, H:2 * H].reshape(Bb * H, T, Dh)
    v = qkv[:, 2 * H:].reshape(Bb * H, T, Dh)

    # scores; the 1/sqrt(Dh) SDPA scale is already folded into the Q weight columns
    s = jnp.einsum('nqd,nkd->nqk', q, k, preferred_element_type=jnp.float32)

    # in-kernel additive causal mask (large finite negative, never -inf)
    row = jax.lax.broadcasted_iota(jnp.int32, (T, T), 0)
    col = jax.lax.broadcasted_iota(jnp.int32, (T, T), 1)
    s = s + jnp.where(col <= row, jnp.float32(0.0), jnp.float32(-1e30))

    m = jnp.max(s, axis=-1, keepdims=True)
    p = jnp.exp(s - m)                                 # unnormalized probabilities
    inv = pl.reciprocal(jnp.sum(p, axis=-1, keepdims=True), approx=True)
    o = jnp.einsum('nqk,nkd->nqd', p.astype(jnp.bfloat16), v,
                   preferred_element_type=jnp.float32) * inv        # (Bb*H, T, Dh) f32

    # lane-dense assembly of torch.cat(heads, dim=-1): bf16 cast, one swapaxes, reshape
    o = jnp.swapaxes(o.astype(jnp.bfloat16).reshape(Bb, H, T, Dh), 1, 2).reshape(N, C)

    # ---- output projection (single (N,C)@(C,C) bf16 matmul) + residual 1 ----
    x = x + jnp.dot(o, wp_ref[...], preferred_element_type=jnp.float32) + bp_ref[...]

    # ---- LayerNorm 2 + FeedForward (Linear -> ReLU -> Linear -> ReLU) + residual 2 ----
    # TODO(synk): for large T / C on v7x (64 MiB VMEM), tile the KV sequence dim with an
    # online-softmax inner loop and tile the 4C FFN hidden dim with an accumulator.
    h2 = _layernorm(x, ln2g_ref[...], ln2b_ref[...]).astype(jnp.bfloat16)
    f = jnp.maximum(
        jnp.dot(h2, w1_ref[...], preferred_element_type=jnp.float32) + b1_ref[...], 0.0)
    f = jnp.maximum(
        jnp.dot(f.astype(jnp.bfloat16), w2_ref[...],
                preferred_element_type=jnp.float32) + b2_ref[...], 0.0)

    o_ref[...] = (x + f).reshape(Bb, T, C)


def transformer_block(x, params, *, n_head, batch_block=1):
    """Apply the transformer Block to x of shape (B, T, C), f32.

    `batch_block` (Bb) batch rows are processed per grid step.  At real model sizes
    pick Bb so N = Bb*T >= ~256 (MXU M fill, per-step overhead amortisation) while
    keeping grid = B // Bb >= 2 so v7x's two TensorCores both get work.
    """
    B, T, C = x.shape
    H = n_head
    assert C % H == 0 and B % batch_block == 0
    Dh = C // H
    scale = 1.0 / math.sqrt(Dh)   # SDPA default scale = 1/sqrt(head_dim)

    # Fused QKV weight with the attention scale folded into the Q columns; all matmul
    # weights cast to bf16 once here.  (Folding before the bf16 cast rounds slightly
    # differently than torch, which scales the scores inside SDPA; difference is tiny.)
    wqkv = jnp.concatenate(
        [params["wq"] * scale, params["wk"], params["wv"]], axis=1).astype(jnp.bfloat16)
    wp = params["wp"].astype(jnp.bfloat16)
    w1 = params["w1"].astype(jnp.bfloat16)
    w2 = params["w2"].astype(jnp.bfloat16)

    Bb = batch_block
    N = Bb * T
    grid = (B // Bb,)

    consts = [params["ln1g"], params["ln1b"], wqkv, wp, params["bp"],
              params["ln2g"], params["ln2b"], w1, params["b1"], w2, params["b2"]]

    def const_spec(arr):
        # grid-invariant operand: single-buffered (no double-buffer VMEM cost)
        return pl.BlockSpec(arr.shape, lambda b, _nd=arr.ndim: (0,) * _nd,
                            pipeline_mode=pl.Buffered(1))

    in_specs = [pl.BlockSpec((Bb, T, C), lambda b: (b, 0, 0))] + \
               [const_spec(c) for c in consts]

    # ---- advisory cost estimate for XLA scheduling around the custom call ----
    matmul_flops = 2 * B * T * C * (3 * C + C + 4 * C + 4 * C)   # qkv + proj + ffn1/2
    attn_flops = 4 * B * H * T * T * Dh                          # scores + P@V
    transcendentals = B * H * T * (T + 1) + 2 * B * T            # exp + recip + rsqrt
    weight_bytes = 2 * 12 * C * C + 4 * 10 * C                   # bf16 weights + f32 vecs
    bytes_accessed = 2 * 4 * B * T * C + weight_bytes
    cost = pl.CostEstimate(flops=matmul_flops + attn_flops,
                           transcendentals=transcendentals,
                           bytes_accessed=bytes_accessed)

    # ---- explicit scoped-VMEM budget (per grid step, with margin) ----
    act_bytes = 2 * 2 * 4 * N * C                 # in + out blocks, double-buffered f32
    scratch_bytes = 2 * N * 3 * C                 # bf16 qkv staging scratch
    live_bytes = 4 * (N * 3 * C + 2 * Bb * H * T * T + N * 4 * C + 2 * N * C)
    need = weight_bytes + act_bytes + scratch_bytes + live_bytes
    # Cap at 64 MiB (v7x physical VMEM); raise toward ~100 MiB when tuning v5e / v6e
    # (128 MiB physical) with larger batch_block / deeper buffering.
    vmem_limit = int(min(max(2 * need, 16 * 1024 * 1024), 64 * 1024 * 1024))

    kernel = functools.partial(block_kernel, num_heads=H)
    return pl.pallas_call(
        kernel,
        out_shape=jax.ShapeDtypeStruct((B, T, C), jnp.float32),
        grid=grid,
        in_specs=in_specs,
        out_specs=pl.BlockSpec((Bb, T, C), lambda b: (b, 0, 0)),
        scratch_shapes=[pltpu.VMEM((N, 3 * C), jnp.bfloat16)],
        compiler_params=pltpu.CompilerParams(
            dimension_semantics=("parallel",),
            vmem_limit_bytes=vmem_limit),
        cost_estimate=cost,
    )(x, *consts)


def init_params(key, n_embd, n_head):
    """Deterministic torch-style init: U(-1/sqrt(fan_in), 1/sqrt(fan_in))."""
    del n_head  # per-head q/k/v weights are stored pre-concatenated as (C, C)
    C = n_embd
    ks = jax.random.split(key, 9)

    def lin(k, fan_in, shape):
        bound = 1.0 / math.sqrt(fan_in)
        return jax.random.uniform(k, shape, jnp.float32, -bound, bound)

    return dict(
        ln1g=jnp.ones((1, C), jnp.float32),
        ln1b=jnp.zeros((1, C), jnp.float32),
        wq=lin(ks[0], C, (C, C)),   # concat of n_head bias-free (C, head) Linears
        wk=lin(ks[1], C, (C, C)),
        wv=lin(ks[2], C, (C, C)),
        wp=lin(ks[3], C, (C, C)),
        bp=lin(ks[4], C, (1, C)),
        ln2g=jnp.ones((1, C), jnp.float32),
        ln2b=jnp.zeros((1, C), jnp.float32),
        w1=lin(ks[5], C, (C, 4 * C)),
        b1=lin(ks[6], C, (1, 4 * C)),
        w2=lin(ks[7], 4 * C, (4 * C, C)),
        b2=lin(ks[8], 4 * C, (1, C)),
    )


def block_reference(x, params, *, n_head):
    """Pure-JAX f32 reference of the torch Block forward (tolerance check only)."""
    B, T, C = x.shape
    H = n_head
    Dh = C // H

    def ln(y, g, b):
        mu = jnp.mean(y, axis=-1, keepdims=True)
        var = jnp.mean((y - mu) ** 2, axis=-1, keepdims=True)
        return (y - mu) / jnp.sqrt(var + LN_EPS) * g + b

    h = ln(x, params["ln1g"], params["ln1b"])
    q = (h @ params["wq"]).reshape(B, T, H, Dh).transpose(0, 2, 1, 3)
    k = (h @ params["wk"]).reshape(B, T, H, Dh).transpose(0, 2, 1, 3)
    v = (h @ params["wv"]).reshape(B, T, H, Dh).transpose(0, 2, 1, 3)
    s = (q @ jnp.swapaxes(k, -1, -2)) / math.sqrt(Dh)
    causal = jnp.tril(jnp.ones((T, T), dtype=bool))
    s = jnp.where(causal, s, -jnp.inf)
    p = jax.nn.softmax(s, axis=-1)
    o = (p @ v).transpose(0, 2, 1, 3).reshape(B, T, C)
    x = x + o @ params["wp"] + params["bp"]
    h2 = ln(x, params["ln2g"], params["ln2b"])
    f = jax.nn.relu(h2 @ params["w1"] + params["b1"])
    f = jax.nn.relu(f @ params["w2"] + params["b2"])
    return x + f


if __name__ == "__main__":
    # small shapes consistent with the module: block_size (seq) = 8, n_embd = 32, n_head = 4
    B, T, C, H = 2, 8, 32, 4
    key = jax.random.PRNGKey(0)
    kx, kp = jax.random.split(key)
    x = jax.random.normal(kx, (B, T, C), jnp.float32)
    params = init_params(kp, C, H)

    # TODO(synk): nn.Dropout modules exist in __init__ but are never applied in the
    # reference forward (Head/MHA forward never call them); treated as no-ops here.
    out = transformer_block(x, params, n_head=H, batch_block=1)
    out = jax.block_until_ready(out)
    assert out.shape == (B, T, C) and out.dtype == jnp.float32
    assert bool(jnp.all(jnp.isfinite(out)))

    # Tolerance check vs. the f32 reference (kernel uses bf16 MXU inputs, folded scale,
    # approx reciprocal -> expected deviation well under 0.1 absolute at these scales).
    ref = block_reference(x, params, n_head=H)
    max_err = float(jnp.max(jnp.abs(out - ref)))
    assert max_err < 0.1, f"max abs error vs reference: {max_err}"
    print("KERNEL_OK")
</pallas_src>

<mosaic_0001>
module attributes {stable_mosaic.version = 11 : i64} {
  func.func @block_kernel(%arg0: i32, %arg1: memref<1x8x32xf32, #tpu.memory_space<vmem>>, %arg2: memref<1x32xf32, #tpu.memory_space<vmem>>, %arg3: memref<1x32xf32, #tpu.memory_space<vmem>>, %arg4: memref<32x96xbf16, #tpu.memory_space<vmem>>, %arg5: memref<32x32xbf16, #tpu.memory_space<vmem>>, %arg6: memref<1x32xf32, #tpu.memory_space<vmem>>, %arg7: memref<1x32xf32, #tpu.memory_space<vmem>>, %arg8: memref<1x32xf32, #tpu.memory_space<vmem>>, %arg9: memref<32x128xbf16, #tpu.memory_space<vmem>>, %arg10: memref<1x128xf32, #tpu.memory_space<vmem>>, %arg11: memref<128x32xbf16, #tpu.memory_space<vmem>>, %arg12: memref<1x32xf32, #tpu.memory_space<vmem>>, %arg13: memref<1x8x32xf32, #tpu.memory_space<vmem>>, %arg14: memref<8x96xbf16, #tpu.memory_space<vmem>>) attributes {dimension_semantics = [#tpu.dimension_semantics<parallel>], iteration_bounds = array<i64: 2>, scalar_prefetch = 0 : i64, scratch_operands = 1 : i64, tpu.core_type = #tpu.core_type<tc>, window_params = [{transform_indices = @transform_0, window_bounds = array<i64: 1, 8, 32>}, {pipeline_mode = #tpu.pipeline_mode<synchronous>, transform_indices = @transform_1, window_bounds = array<i64: 1, 32>}, {pipeline_mode = #tpu.pipeline_mode<synchronous>, transform_indices = @transform_2, window_bounds = array<i64: 1, 32>}, {pipeline_mode = #tpu.pipeline_mode<synchronous>, transform_indices = @transform_3, window_bounds = array<i64: 32, 96>}, {pipeline_mode = #tpu.pipeline_mode<synchronous>, transform_indices = @transform_4, window_bounds = array<i64: 32, 32>}, {pipeline_mode = #tpu.pipeline_mode<synchronous>, transform_indices = @transform_5, window_bounds = array<i64: 1, 32>}, {pipeline_mode = #tpu.pipeline_mode<synchronous>, transform_indices = @transform_6, window_bounds = array<i64: 1, 32>}, {pipeline_mode = #tpu.pipeline_mode<synchronous>, transform_indices = @transform_7, window_bounds = array<i64: 1, 32>}, {pipeline_mode = #tpu.pipeline_mode<synchronous>, transform_indices = @transform_8, window_bounds = array<i64: 32, 128>}, {pipeline_mode = #tpu.pipeline_mode<synchronous>, transform_indices = @transform_9, window_bounds = array<i64: 1, 128>}, {pipeline_mode = #tpu.pipeline_mode<synchronous>, transform_indices = @transform_10, window_bounds = array<i64: 128, 32>}, {pipeline_mode = #tpu.pipeline_mode<synchronous>, transform_indices = @transform_11, window_bounds = array<i64: 1, 32>}, {transform_indices = @transform_12, window_bounds = array<i64: 1, 8, 32>}]} {
    %c0 = arith.constant 0 : index
    %c0_0 = arith.constant 0 : index
    %c0_1 = arith.constant 0 : index
    %0 = vector.load %arg1[%c0, %c0_0, %c0_1] : memref<1x8x32xf32, #tpu.memory_space<vmem>>, vector<1x8x32xf32>
    %1 = vector.shape_cast %0 : vector<1x8x32xf32> to vector<8x32xf32>
    %c0_2 = arith.constant 0 : index
    %c0_3 = arith.constant 0 : index
    %2 = vector.load %arg2[%c0_2, %c0_3] : memref<1x32xf32, #tpu.memory_space<vmem>>, vector<1x32xf32>
    %c0_4 = arith.constant 0 : index
    %c0_5 = arith.constant 0 : index
    %3 = vector.load %arg3[%c0_4, %c0_5] : memref<1x32xf32, #tpu.memory_space<vmem>>, vector<1x32xf32>
    %cst = arith.constant dense<0.000000e+00> : vector<8xf32>
    %4 = vector.multi_reduction <add>, %1, %cst [1] : vector<8x32xf32> to vector<8xf32>
    %5 = vector.shape_cast %4 : vector<8xf32> to vector<8x1xf32>
    %cst_6 = arith.constant 3.200000e+01 : f32
    %6 = vector.broadcast %cst_6 : f32 to vector<8x1xf32>
    %7 = arith.divf %5, %6 : vector<8x1xf32>
    %8 = vector.broadcast %7 : vector<8x1xf32> to vector<8x32xf32>
    %9 = arith.subf %1, %8 : vector<8x32xf32>
    %10 = arith.mulf %9, %9 : vector<8x32xf32>
    %cst_7 = arith.constant dense<0.000000e+00> : vector<8xf32>
    %11 = vector.multi_reduction <add>, %10, %cst_7 [1] : vector<8x32xf32> to vector<8xf32>
    %12 = vector.shape_cast %11 : vector<8xf32> to vector<8x1xf32>
    %cst_8 = arith.constant 3.200000e+01 : f32
    %13 = vector.broadcast %cst_8 : f32 to vector<8x1xf32>
    %14 = arith.divf %12, %13 : vector<8x1xf32>
    %15 = vector.broadcast %7 : vector<8x1xf32> to vector<8x32xf32>
    %16 = arith.subf %1, %15 : vector<8x32xf32>
    %cst_9 = arith.constant 9.99999974E-6 : f32
    %17 = vector.broadcast %cst_9 : f32 to vector<8x1xf32>
    %18 = arith.addf %14, %17 : vector<8x1xf32>
    %19 = math.rsqrt %18 : vector<8x1xf32>
    %20 = vector.broadcast %19 : vector<8x1xf32> to vector<8x32xf32>
    %21 = arith.mulf %16, %20 : vector<8x32xf32>
    %22 = vector.broadcast %2 : vector<1x32xf32> to vector<8x32xf32>
    %23 = arith.mulf %21, %22 : vector<8x32xf32>
    %24 = vector.broadcast %3 : vector<1x32xf32> to vector<8x32xf32>
    %25 = arith.addf %23, %24 : vector<8x32xf32>
    %26 = arith.truncf %25 : vector<8x32xf32> to vector<8x32xbf16>
    %c0_10 = arith.constant 0 : index
    %c0_11 = arith.constant 0 : index
    %27 = vector.load %arg4[%c0_10, %c0_11] : memref<32x96xbf16, #tpu.memory_space<vmem>>, vector<32x96xbf16>
    %cst_12 = arith.constant dense<0.000000e+00> : vector<8x96xf32>
    %28 = tpu.matmul %26, %27, %cst_12 {dimension_numbers = #tpu.dot_dimension_numbers<[1], [0], [0], [1], [0, 0, 1, 1], [], []>} : vector<8x32xbf16>, vector<32x96xbf16>, vector<8x96xf32> -> vector<8x96xf32>
    %29 = arith.truncf %28 : vector<8x96xf32> to vector<8x96xbf16>
    %c0_13 = arith.constant 0 : index
    %c0_14 = arith.constant 0 : index
    %30 = vector.load %arg14[%c0_13, %c0_14] : memref<8x96xbf16, #tpu.memory_space<vmem>>, vector<8x96xbf16>
    tpu.vector_store %arg14[%c0_13, %c0_14], %29 {strides = array<i32>} : memref<8x96xbf16, #tpu.memory_space<vmem>>, vector<8x96xbf16>,
    %c0_15 = arith.constant 0 : index
    %c0_16 = arith.constant 0 : index
    %31 = vector.load %arg14[%c0_15, %c0_16] : memref<8x96xbf16, #tpu.memory_space<vmem>>, vector<8x96xbf16>
    %32 = vector.shape_cast %31 : vector<8x96xbf16> to vector<1x8x12x8xbf16>
    %33 = tpu.transpose %32, [0, 2, 1, 3] : vector<1x8x12x8xbf16> -> vector<1x12x8x8xbf16>
    %34 = vector.extract_strided_slice %33 {offsets = [0, 0, 0, 0], sizes = [1, 4, 8, 8], strides = [1, 1, 1, 1]} : vector<1x12x8x8xbf16> to vector<1x4x8x8xbf16>
    %35 = vector.shape_cast %34 : vector<1x4x8x8xbf16> to vector<4x8x8xbf16>
    %36 = vector.extract_strided_slice %33 {offsets = [0, 4, 0, 0], sizes = [1, 4, 8, 8], strides = [1, 1, 1, 1]} : vector<1x12x8x8xbf16> to vector<1x4x8x8xbf16>
    %37 = vector.shape_cast %36 : vector<1x4x8x8xbf16> to vector<4x8x8xbf16>
    %38 = vector.extract_strided_slice %33 {offsets = [0, 8, 0, 0], sizes = [1, 4, 8, 8], strides = [1, 1, 1, 1]} : vector<1x12x8x8xbf16> to vector<1x4x8x8xbf16>
    %39 = vector.shape_cast %38 : vector<1x4x8x8xbf16> to vector<4x8x8xbf16>
    "tpu.trace_start"() <{level = 10 : i32, message = "nqd,nkd->nqk"}> : () -> ()
    %cst_17 = arith.constant dense<0.000000e+00> : vector<4x8x8xf32>
    %40 = tpu.matmul %35, %37, %cst_17 {dimension_numbers = #tpu.dot_dimension_numbers<[2], [2], [1], [1], [0, 0, 0, 1, 1, 1], [0], [0]>} : vector<4x8x8xbf16>, vector<4x8x8xbf16>, vector<4x8x8xf32> -> vector<4x8x8xf32>
    "tpu.trace_stop"() : () -> ()
    %41 = tpu.iota {dimensions = array<i32: 0>} : vector<8x8xi32>
    %42 = tpu.iota {dimensions = array<i32: 1>} : vector<8x8xi32>
    %43 = arith.cmpi sle, %42, %41 : vector<8x8xi32>
    %cst_18 = arith.constant 0.000000e+00 : f32
    %cst_19 = arith.constant -1.000000e+30 : f32
    %44 = vector.broadcast %cst_18 : f32 to vector<8x8xf32>
    %45 = vector.broadcast %cst_19 : f32 to vector<8x8xf32>
    %46 = arith.select %43, %44, %45 : vector<8x8xi1>, vector<8x8xf32>
    %47 = vector.shape_cast %46 : vector<8x8xf32> to vector<1x8x8xf32>
    %48 = vector.broadcast %47 : vector<1x8x8xf32> to vector<4x8x8xf32>
    %49 = arith.addf %40, %48 : vector<4x8x8xf32>
    %cst_20 = arith.constant dense<0xFF800000> : vector<4x8xf32>
    %50 = vector.multi_reduction <maximumf>, %49, %cst_20 [2] : vector<4x8x8xf32> to vector<4x8xf32>
    %51 = vector.shape_cast %50 : vector<4x8xf32> to vector<4x8x1xf32>
    %52 = vector.broadcast %51 : vector<4x8x1xf32> to vector<4x8x8xf32>
    %53 = arith.subf %49, %52 : vector<4x8x8xf32>
    %54 = math.exp %53 : vector<4x8x8xf32>
    %cst_21 = arith.constant dense<0.000000e+00> : vector<4x8xf32>
    %55 = vector.multi_reduction <add>, %54, %cst_21 [2] : vector<4x8x8xf32> to vector<4x8xf32>
    %56 = vector.shape_cast %55 : vector<4x8xf32> to vector<4x8x1xf32>
    %57 = tpu.reciprocal %56 {approx = true} : vector<4x8x1xf32> -> vector<4x8x1xf32>
    %58 = arith.truncf %54 : vector<4x8x8xf32> to vector<4x8x8xbf16>
    "tpu.trace_start"() <{level = 10 : i32, message = "nqk,nkd->nqd"}> : () -> ()
    %cst_22 = arith.constant dense<0.000000e+00> : vector<4x8x8xf32>
    %59 = tpu.matmul %58, %39, %cst_22 {dimension_numbers = #tpu.dot_dimension_numbers<[2], [1], [1], [2], [0, 0, 0, 1, 1, 2], [0], [0]>} : vector<4x8x8xbf16>, vector<4x8x8xbf16>, vector<4x8x8xf32> -> vector<4x8x8xf32>
    "tpu.trace_stop"() : () -> ()
    %60 = vector.broadcast %57 : vector<4x8x1xf32> to vector<4x8x8xf32>
    %61 = arith.mulf %59, %60 : vector<4x8x8xf32>
    %62 = arith.truncf %61 : vector<4x8x8xf32> to vector<4x8x8xbf16>
    %63 = vector.shape_cast %62 : vector<4x8x8xbf16> to vector<1x4x8x8xbf16>
    %64 = tpu.transpose %63, [0, 2, 1, 3] : vector<1x4x8x8xbf16> -> vector<1x8x4x8xbf16>
    %65 = vector.shape_cast %64 : vector<1x8x4x8xbf16> to vector<8x32xbf16>
    %c0_23 = arith.constant 0 : index
    %c0_24 = arith.constant 0 : index
    %66 = vector.load %arg5[%c0_23, %c0_24] : memref<32x32xbf16, #tpu.memory_space<vmem>>, vector<32x32xbf16>
    %cst_25 = arith.constant dense<0.000000e+00> : vector<8x32xf32>
    %67 = tpu.matmul %65, %66, %cst_25 {dimension_numbers = #tpu.dot_dimension_numbers<[1], [0], [0], [1], [0, 0, 1, 1], [], []>} : vector<8x32xbf16>, vector<32x32xbf16>, vector<8x32xf32> -> vector<8x32xf32>
    %68 = arith.addf %1, %67 : vector<8x32xf32>
    %c0_26 = arith.constant 0 : index
    %c0_27 = arith.constant 0 : index
    %69 = vector.load %arg6[%c0_26, %c0_27] : memref<1x32xf32, #tpu.memory_space<vmem>>, vector<1x32xf32>
    %70 = vector.broadcast %69 : vector<1x32xf32> to vector<8x32xf32>
    %71 = arith.addf %68, %70 : vector<8x32xf32>
    %c0_28 = arith.constant 0 : index
    %c0_29 = arith.constant 0 : index
    %72 = vector.load %arg7[%c0_28, %c0_29] : memref<1x32xf32, #tpu.memory_space<vmem>>, vector<1x32xf32>
    %c0_30 = arith.constant 0 : index
    %c0_31 = arith.constant 0 : index
    %73 = vector.load %arg8[%c0_30, %c0_31] : memref<1x32xf32, #tpu.memory_space<vmem>>, vector<1x32xf32>
    %cst_32 = arith.constant dense<0.000000e+00> : vector<8xf32>
    %74 = vector.multi_reduction <add>, %71, %cst_32 [1] : vector<8x32xf32> to vector<8xf32>
    %75 = vector.shape_cast %74 : vector<8xf32> to vector<8x1xf32>
    %cst_33 = arith.constant 3.200000e+01 : f32
    %76 = vector.broadcast %cst_33 : f32 to vector<8x1xf32>
    %77 = arith.divf %75, %76 : vector<8x1xf32>
    %78 = vector.broadcast %77 : vector<8x1xf32> to vector<8x32xf32>
    %79 = arith.subf %71, %78 : vector<8x32xf32>
    %80 = arith.mulf %79, %79 : vector<8x32xf32>
    %cst_34 = arith.constant dense<0.000000e+00> : vector<8xf32>
    %81 = vector.multi_reduction <add>, %80, %cst_34 [1] : vector<8x32xf32> to vector<8xf32>
    %82 = vector.shape_cast %81 : vector<8xf32> to vector<8x1xf32>
    %cst_35 = arith.constant 3.200000e+01 : f32
    %83 = vector.broadcast %cst_35 : f32 to vector<8x1xf32>
    %84 = arith.divf %82, %83 : vector<8x1xf32>
    %85 = vector.broadcast %77 : vector<8x1xf32> to vector<8x32xf32>
    %86 = arith.subf %71, %85 : vector<8x32xf32>
    %cst_36 = arith.constant 9.99999974E-6 : f32
    %87 = vector.broadcast %cst_36 : f32 to vector<8x1xf32>
    %88 = arith.addf %84, %87 : vector<8x1xf32>
    %89 = math.rsqrt %88 : vector<8x1xf32>
    %90 = vector.broadcast %89 : vector<8x1xf32> to vector<8x32xf32>
    %91 = arith.mulf %86, %90 : vector<8x32xf32>
    %92 = vector.broadcast %72 : vector<1x32xf32> to vector<8x32xf32>
    %93 = arith.mulf %91, %92 : vector<8x32xf32>
    %94 = vector.broadcast %73 : vector<1x32xf32> to vector<8x32xf32>
    %95 = arith.addf %93, %94 : vector<8x32xf32>
    %96 = arith.truncf %95 : vector<8x32xf32> to vector<8x32xbf16>
    %c0_37 = arith.constant 0 : index
    %c0_38 = arith.constant 0 : index
    %97 = vector.load %arg9[%c0_37, %c0_38] : memref<32x128xbf16, #tpu.memory_space<vmem>>, vector<32x128xbf16>
    %cst_39 = arith.constant dense<0.000000e+00> : vector<8x128xf32>
    %98 = tpu.matmul %96, %97, %cst_39 {dimension_numbers = #tpu.dot_dimension_numbers<[1], [0], [0], [1], [0, 0, 1, 1], [], []>} : vector<8x32xbf16>, vector<32x128xbf16>, vector<8x128xf32> -> vector<8x128xf32>
    %c0_40 = arith.constant 0 : index
    %c0_41 = arith.constant 0 : index
    %99 = vector.load %arg10[%c0_40, %c0_41] : memref<1x128xf32, #tpu.memory_space<vmem>>, vector<1x128xf32>
    %100 = vector.broadcast %99 : vector<1x128xf32> to vector<8x128xf32>
    %101 = arith.addf %98, %100 : vector<8x128xf32>
    %cst_42 = arith.constant 0.000000e+00 : f32
    %102 = vector.broadcast %cst_42 : f32 to vector<8x128xf32>
    %103 = arith.maximumf %101, %102 : vector<8x128xf32>
    %104 = arith.truncf %103 : vector<8x128xf32> to vector<8x128xbf16>
    %c0_43 = arith.constant 0 : index
    %c0_44 = arith.constant 0 : index
    %105 = vector.load %arg11[%c0_43, %c0_44] : memref<128x32xbf16, #tpu.memory_space<vmem>>, vector<128x32xbf16>
    %cst_45 = arith.constant dense<0.000000e+00> : vector<8x32xf32>
    %106 = tpu.matmul %104, %105, %cst_45 {dimension_numbers = #tpu.dot_dimension_numbers<[1], [0], [0], [1], [0, 0, 1, 1], [], []>} : vector<8x128xbf16>, vector<128x32xbf16>, vector<8x32xf32> -> vector<8x32xf32>
    %c0_46 = arith.constant 0 : index
    %c0_47 = arith.constant 0 : index
    %107 = vector.load %arg12[%c0_46, %c0_47] : memref<1x32xf32, #tpu.memory_space<vmem>>, vector<1x32xf32>
    %108 = vector.broadcast %107 : vector<1x32xf32> to vector<8x32xf32>
    %109 = arith.addf %106, %108 : vector<8x32xf32>
    %cst_48 = arith.constant 0.000000e+00 : f32
    %110 = vector.broadcast %cst_48 : f32 to vector<8x32xf32>
    %111 = arith.maximumf %109, %110 : vector<8x32xf32>
    %112 = arith.addf %71, %111 : vector<8x32xf32>
    %113 = vector.shape_cast %112 : vector<8x32xf32> to vector<1x8x32xf32>
    %c0_49 = arith.constant 0 : index
    %c0_50 = arith.constant 0 : index
    %c0_51 = arith.constant 0 : index
    %114 = vector.load %arg13[%c0_49, %c0_50, %c0_51] : memref<1x8x32xf32, #tpu.memory_space<vmem>>, vector<1x8x32xf32>
    tpu.vector_store %arg13[%c0_49, %c0_50, %c0_51], %113 {strides = array<i32>} : memref<1x8x32xf32, #tpu.memory_space<vmem>>, vector<1x8x32xf32>,
    return
  }
  func.func @transform_0(%arg0: i32) -> (i32, i32, i32) {
    %c0_i32 = arith.constant 0 : i32
    %c0_i32_0 = arith.constant 0 : i32
    %c0_i32_1 = arith.constant 0 : i32
    return %arg0, %c0_i32, %c0_i32_0 : i32, i32, i32
  }
  func.func @transform_1(%arg0: i32) -> (i32, i32) {
    %c0_i32 = arith.constant 0 : i32
    %c0_i32_0 = arith.constant 0 : i32
    %c0_i32_1 = arith.constant 0 : i32
    return %c0_i32, %c0_i32_0 : i32, i32
  }
  func.func @transform_2(%arg0: i32) -> (i32, i32) {
    %c0_i32 = arith.constant 0 : i32
    %c0_i32_0 = arith.constant 0 : i32
    %c0_i32_1 = arith.constant 0 : i32
    return %c0_i32, %c0_i32_0 : i32, i32
  }
  func.func @transform_3(%arg0: i32) -> (i32, i32) {
    %c0_i32 = arith.constant 0 : i32
    %c0_i32_0 = arith.constant 0 : i32
    %c0_i32_1 = arith.constant 0 : i32
    return %c0_i32, %c0_i32_0 : i32, i32
  }
  func.func @transform_4(%arg0: i32) -> (i32, i32) {
    %c0_i32 = arith.constant 0 : i32
    %c0_i32_0 = arith.constant 0 : i32
    %c0_i32_1 = arith.constant 0 : i32
    return %c0_i32, %c0_i32_0 : i32, i32
  }
  func.func @transform_5(%arg0: i32) -> (i32, i32) {
    %c0_i32 = arith.constant 0 : i32
    %c0_i32_0 = arith.constant 0 : i32
    %c0_i32_1 = arith.constant 0 : i32
    return %c0_i32, %c0_i32_0 : i32, i32
  }
  func.func @transform_6(%arg0: i32) -> (i32, i32) {
    %c0_i32 = arith.constant 0 : i32
    %c0_i32_0 = arith.constant 0 : i32
    %c0_i32_1 = arith.constant 0 : i32
    return %c0_i32, %c0_i32_0 : i32, i32
  }
  func.func @transform_7(%arg0: i32) -> (i32, i32) {
    %c0_i32 = arith.constant 0 : i32
    %c0_i32_0 = arith.constant 0 : i32
    %c0_i32_1 = arith.constant 0 : i32
    return %c0_i32, %c0_i32_0 : i32, i32
  }
  func.func @transform_8(%arg0: i32) -> (i32, i32) {
    %c0_i32 = arith.constant 0 : i32
    %c0_i32_0 = arith.constant 0 : i32
    %c0_i32_1 = arith.constant 0 : i32
    return %c0_i32, %c0_i32_0 : i32, i32
  }
  func.func @transform_9(%arg0: i32) -> (i32, i32) {
    %c0_i32 = arith.constant 0 : i32
    %c0_i32_0 = arith.constant 0 : i32
    %c0_i32_1 = arith.constant 0 : i32
    return %c0_i32, %c0_i32_0 : i32, i32
  }
  func.func @transform_10(%arg0: i32) -> (i32, i32) {
    %c0_i32 = arith.constant 0 : i32
    %c0_i32_0 = arith.constant 0 : i32
    %c0_i32_1 = arith.constant 0 : i32
    return %c0_i32, %c0_i32_0 : i32, i32
  }
  func.func @transform_11(%arg0: i32) -> (i32, i32) {
    %c0_i32 = arith.constant 0 : i32
    %c0_i32_0 = arith.constant 0 : i32
    %c0_i32_1 = arith.constant 0 : i32
    return %c0_i32, %c0_i32_0 : i32, i32
  }
  func.func @transform_12(%arg0: i32) -> (i32, i32, i32) {
    %c0_i32 = arith.constant 0 : i32
    %c0_i32_0 = arith.constant 0 : i32
    %c0_i32_1 = arith.constant 0 : i32
    return %arg0, %c0_i32, %c0_i32_0 : i32, i32, i32
  }
}

</mosaic_0001>

<llo_original>
// kernel: tpu_custom_call.1
$region0: #{tpu_custom_call.1}
  #allocation0 [shape = 'u32[]', space=smem, size = 0x4, offset = 0x4, fixed_abs, tag = 'smem constant byte address 0x4 - core index']
  #allocation1 [shape = 'u32[144,128]{1,0:T(1,128)}', space=vmem, size = 0x12000, scoped, tag = 'internal scratch']
  #allocation2 [shape = 'bf16[8,96]{1,0:T(8,128)(2,1)}', space=vmem, size = 0x800, scoped, tag = 'scratch operand']
  %s0 = inlined_call_operand.vmem [shape: f32[2,8,32], index: 0, kind: input, shape index: {}]
  %s1 = inlined_call_operand.vmem [shape: f32[1,32], index: 1, kind: input, shape index: {}]
  %s2 = inlined_call_operand.vmem [shape: f32[1,32], index: 2, kind: input, shape index: {}]
  %s3 = inlined_call_operand.vmem [shape: bf16[32,96], index: 3, kind: input, shape index: {}]
  %s4 = inlined_call_operand.vmem [shape: bf16[32,32], index: 4, kind: input, shape index: {}]
  %s5 = inlined_call_operand.vmem [shape: f32[1,32], index: 5, kind: input, shape index: {}]
  %s6 = inlined_call_operand.vmem [shape: f32[1,32], index: 6, kind: input, shape index: {}]
  %s7 = inlined_call_operand.vmem [shape: f32[1,32], index: 7, kind: input, shape index: {}]
  %s8 = inlined_call_operand.vmem [shape: bf16[32,128], index: 8, kind: input, shape index: {}]
  %s9 = inlined_call_operand.vmem [shape: f32[1,128], index: 9, kind: input, shape index: {}]
  %s10 = inlined_call_operand.vmem [shape: bf16[128,32], index: 10, kind: input, shape index: {}]
  %s11 = inlined_call_operand.vmem [shape: f32[1,32], index: 11, kind: input, shape index: {}]
  %s12 = inlined_call_operand.hbm [shape: f32[2,8,32], index: 12, kind: output, shape index: {}]
  %s13 = sld [smem:[#allocation0]]
  $region81: #{tpu_custom_call.1} parent=0
    _
  %s15 = ssub.s32 1, %s13
  %s16 = scalar_select 0, %s15, %s13
  $region1: #{tpu_custom_call.1} parent=0
    #allocation3 [shape = 'u8[8192]{0}', space=vmem, size = 0x2000, scoped, tag = 'output window, operand 0']
    #allocation4 [shape = 's32[2]{0}', space=sflag, size = 0x8, scoped, tag = 'scoped memory for tpu_custom_call.1']
    %17 = vsyncpa [#allocation4], 0
    %s18 = scalar_lea.sflag [#allocation4], 1
    %19 = vsyncpa %s18, 0
    loop: start=0, step=1, limit=4
    $region2: #{tpu_custom_call.1} parent=1 // loop_pre_header
      _
    $region3: #{tpu_custom_call.1} parent=1 // loop_header
      %s21 = sphi 0, %s25
      %p22 = scmp.ge.s32.totalorder %s21, 4
      %s31 = sphi 0, %s33
      %s34 = sphi 0, %s31
      %s35 = sphi 0, %s34
      %s51 = sphi 0, %s35
      %s55 = sphi 0, %s55
      %s57 = sphi 0, %s55
      %s58 = sphi 0, %s57
      %s72 = sphi 0, %s58
      %s76 = sphi 0, %s76
      %s78 = sphi 0, %s76
      %s79 = sphi 0, %s78
      %s93 = sphi 0, %s79
      %s97 = sphi 0, %s97
      %s99 = sphi 0, %s97
      %s100 = sphi 0, %s99
      %s114 = sphi 0, %s100
      %s118 = sphi 0, %s118
      %s120 = sphi 0, %s118
      %s121 = sphi 0, %s120
      %s135 = sphi 0, %s121
      %s139 = sphi 0, %s139
      %s141 = sphi 0, %s139
      %s142 = sphi 0, %s141
      %s156 = sphi 0, %s142
      %s160 = sphi 0, %s160
      %s162 = sphi 0, %s160
      %s163 = sphi 0, %s162
      %s177 = sphi 0, %s163
      %s181 = sphi 0, %s181
      %s183 = sphi 0, %s181
      %s184 = sphi 0, %s183
      %s198 = sphi 0, %s184
      %s202 = sphi 0, %s202
      %s204 = sphi 0, %s202
      %s205 = sphi 0, %s204
      %s219 = sphi 0, %s205
      %s223 = sphi 0, %s223
      %s225 = sphi 0, %s223
      %s226 = sphi 0, %s225
      %s240 = sphi 0, %s226
      %s244 = sphi 0, %s244
      %s246 = sphi 0, %s244
      %s247 = sphi 0, %s246
      %s261 = sphi 0, %s247
      %s265 = sphi 0, %s265
      %s267 = sphi 0, %s265
      %s268 = sphi 0, %s267
      %s282 = sphi 0, %s268
      %s288 = sphi 0, %s290
      %s291 = sphi 0, %s288
      %s292 = sphi 0, %s291
      %s308 = sphi 0, %s292
    $region4: #{tpu_custom_call.1} parent=1 // loop_header_branch
      %24 = sbr.rel (%p22) target = $region8
    $region5: #{tpu_custom_call.1} parent=1 // loop_body
      %s26 = ssub.s32 %s21, 1
      %s27 = ssub.s32 %s21, 2
      %s28 = sadd.s32 %s21, 1
      %s29 = ssub.s32 %s21, %s28
      %p30 = scmp.eq.s32.totalorder %s29, 0
      %s32 = sadd.s32 %s31, 1
      %s33 = scalar_select %p30, %s31, %s32
      %p36 = pneg %p30
      %p37 = scmp.eq.s32.totalorder %s21, 1
      %p38 = por %p36, %p37
      %p39 = scmp.ne.s32.totalorder %s31, %s34
      %p40 = scmp.eq.s32.totalorder %s21, 0
      %p41 = por %p39, %p40
      %p42 = scmp.ne.s32.totalorder %s31, %s34
      %p43 = scmp.eq.s32.totalorder %s26, 1
      %p44 = por %p42, %p43
      %p45 = scmp.ne.s32.totalorder %s34, %s35
      %p46 = scmp.eq.s32.totalorder %s26, 0
      %p47 = por %p45, %p46
      %p48 = scmp.ne.s32.totalorder %s34, %s35
      %p49 = scmp.eq.s32.totalorder %s27, 1
      %p50 = por %p48, %p49
      %p52 = scmp.ne.s32.totalorder %s35, %s51
      %p53 = scmp.eq.s32.totalorder %s27, 0
      %p54 = por %p52, %p53
      %s56 = sadd.s32 %s55, 1
      %p59 = scmp.eq.s32.totalorder %s21, 1
      %p60 = scmp.ne.s32.totalorder %s55, %s57
      %p61 = scmp.eq.s32.totalorder %s21, 0
      %p62 = por %p60, %p61
      %p63 = scmp.ne.s32.totalorder %s55, %s57
      %p64 = scmp.eq.s32.totalorder %s26, 1
      %p65 = por %p63, %p64
      %p66 = scmp.ne.s32.totalorder %s57, %s58
      %p67 = scmp.eq.s32.totalorder %s26, 0
      %p68 = por %p66, %p67
      %p69 = scmp.ne.s32.totalorder %s57, %s58
      %p70 = scmp.eq.s32.totalorder %s27, 1
      %p71 = por %p69, %p70
      %p73 = scmp.ne.s32.totalorder %s58, %s72
      %p74 = scmp.eq.s32.totalorder %s27, 0
      %p75 = por %p73, %p74
      %s77 = sadd.s32 %s76, 1
      %p80 = scmp.eq.s32.totalorder %s21, 1
      %p81 = scmp.ne.s32.totalorder %s76, %s78
      %p82 = scmp.eq.s32.totalorder %s21, 0
      %p83 = por %p81, %p82
      %p84 = scmp.ne.s32.totalorder %s76, %s78
      %p85 = scmp.eq.s32.totalorder %s26, 1
      %p86 = por %p84, %p85
      %p87 = scmp.ne.s32.totalorder %s78, %s79
      %p88 = scmp.eq.s32.totalorder %s26, 0
      %p89 = por %p87, %p88
      %p90 = scmp.ne.s32.totalorder %s78, %s79
      %p91 = scmp.eq.s32.totalorder %s27, 1
      %p92 = por %p90, %p91
      %p94 = scmp.ne.s32.totalorder %s79, %s93
      %p95 = scmp.eq.s32.totalorder %s27, 0
      %p96 = por %p94, %p95
      %s98 = sadd.s32 %s97, 1
      %p101 = scmp.eq.s32.totalorder %s21, 1
      %p102 = scmp.ne.s32.totalorder %s97, %s99
      %p103 = scmp.eq.s32.totalorder %s21, 0
      %p104 = por %p102, %p103
      %p105 = scmp.ne.s32.totalorder %s97, %s99
      %p106 = scmp.eq.s32.totalorder %s26, 1
      %p107 = por %p105, %p106
      %p108 = scmp.ne.s32.totalorder %s99, %s100
      %p109 = scmp.eq.s32.totalorder %s26, 0
      %p110 = por %p108, %p109
      %p111 = scmp.ne.s32.totalorder %s99, %s100
      %p112 = scmp.eq.s32.totalorder %s27, 1
      %p113 = por %p111, %p112
      %p115 = scmp.ne.s32.totalorder %s100, %s114
      %p116 = scmp.eq.s32.totalorder %s27, 0
      %p117 = por %p115, %p116
      %s119 = sadd.s32 %s118, 1
      %p122 = scmp.eq.s32.totalorder %s21, 1
      %p123 = scmp.ne.s32.totalorder %s118, %s120
      %p124 = scmp.eq.s32.totalorder %s21, 0
      %p125 = por %p123, %p124
      %p126 = scmp.ne.s32.totalorder %s118, %s120
      %p127 = scmp.eq.s32.totalorder %s26, 1
      %p128 = por %p126, %p127
      %p129 = scmp.ne.s32.totalorder %s120, %s121
      %p130 = scmp.eq.s32.totalorder %s26, 0
      %p131 = por %p129, %p130
      %p132 = scmp.ne.s32.totalorder %s120, %s121
      %p133 = scmp.eq.s32.totalorder %s27, 1
      %p134 = por %p132, %p133
      %p136 = scmp.ne.s32.totalorder %s121, %s135
      %p137 = scmp.eq.s32.totalorder %s27, 0
      %p138 = por %p136, %p137
      %s140 = sadd.s32 %s139, 1
      %p143 = scmp.eq.s32.totalorder %s21, 1
      %p144 = scmp.ne.s32.totalorder %s139, %s141
      %p145 = scmp.eq.s32.totalorder %s21, 0
      %p146 = por %p144, %p145
      %p147 = scmp.ne.s32.totalorder %s139, %s141
      %p148 = scmp.eq.s32.totalorder %s26, 1
      %p149 = por %p147, %p148
      %p150 = scmp.ne.s32.totalorder %s141, %s142
      %p151 = scmp.eq.s32.totalorder %s26, 0
      %p152 = por %p150, %p151
      %p153 = scmp.ne.s32.totalorder %s141, %s142
      %p154 = scmp.eq.s32.totalorder %s27, 1
      %p155 = por %p153, %p154
      %p157 = scmp.ne.s32.totalorder %s142, %s156
      %p158 = scmp.eq.s32.totalorder %s27, 0
      %p159 = por %p157, %p158
      %s161 = sadd.s32 %s160, 1
      %p164 = scmp.eq.s32.totalorder %s21, 1
      %p165 = scmp.ne.s32.totalorder %s160, %s162
      %p166 = scmp.eq.s32.totalorder %s21, 0
      %p167 = por %p165, %p166
      %p168 = scmp.ne.s32.totalorder %s160, %s162
      %p169 = scmp.eq.s32.totalorder %s26, 1
      %p170 = por %p168, %p169
      %p171 = scmp.ne.s32.totalorder %s162, %s163
      %p172 = scmp.eq.s32.totalorder %s26, 0
      %p173 = por %p171, %p172
      %p174 = scmp.ne.s32.totalorder %s162, %s163
      %p175 = scmp.eq.s32.totalorder %s27, 1
      %p176 = por %p174, %p175
      %p178 = scmp.ne.s32.totalorder %s163, %s177
      %p179 = scmp.eq.s32.totalorder %s27, 0
      %p180 = por %p178, %p179
      %s182 = sadd.s32 %s181, 1
      %p185 = scmp.eq.s32.totalorder %s21, 1
      %p186 = scmp.ne.s32.totalorder %s181, %s183
      %p187 = scmp.eq.s32.totalorder %s21, 0
      %p188 = por %p186, %p187
      %p189 = scmp.ne.s32.totalorder %s181, %s183
      %p190 = scmp.eq.s32.totalorder %s26, 1
      %p191 = por %p189, %p190
      %p192 = scmp.ne.s32.totalorder %s183, %s184
      %p193 = scmp.eq.s32.totalorder %s26, 0
      %p194 = por %p192, %p193
      %p195 = scmp.ne.s32.totalorder %s183, %s184
      %p196 = scmp.eq.s32.totalorder %s27, 1
      %p197 = por %p195, %p196
      %p199 = scmp.ne.s32.totalorder %s184, %s198
      %p200 = scmp.eq.s32.totalorder %s27, 0
      %p201 = por %p199, %p200
      %s203 = sadd.s32 %s202, 1
      %p206 = scmp.eq.s32.totalorder %s21, 1
      %p207 = scmp.ne.s32.totalorder %s202, %s204
      %p208 = scmp.eq.s32.totalorder %s21, 0
      %p209 = por %p207, %p208
      %p210 = scmp.ne.s32.totalorder %s202, %s204
      %p211 = scmp.eq.s32.totalorder %s26, 1
      %p212 = por %p210, %p211
      %p213 = scmp.ne.s32.totalorder %s204, %s205
      %p214 = scmp.eq.s32.totalorder %s26, 0
      %p215 = por %p213, %p214
      %p216 = scmp.ne.s32.totalorder %s204, %s205
      %p217 = scmp.eq.s32.totalorder %s27, 1
      %p218 = por %p216, %p217
      %p220 = scmp.ne.s32.totalorder %s205, %s219
      %p221 = scmp.eq.s32.totalorder %s27, 0
      %p222 = por %p220, %p221
      %s224 = sadd.s32 %s223, 1
      %p227 = scmp.eq.s32.totalorder %s21, 1
      %p228 = scmp.ne.s32.totalorder %s223, %s225
      %p229 = scmp.eq.s32.totalorder %s21, 0
      %p230 = por %p228, %p229
      %p231 = scmp.ne.s32.totalorder %s223, %s225
      %p232 = scmp.eq.s32.totalorder %s26, 1
      %p233 = por %p231, %p232
      %p234 = scmp.ne.s32.totalorder %s225, %s226
      %p235 = scmp.eq.s32.totalorder %s26, 0
      %p236 = por %p234, %p235
      %p237 = scmp.ne.s32.totalorder %s225, %s226
      %p238 = scmp.eq.s32.totalorder %s27, 1
      %p239 = por %p237, %p238
      %p241 = scmp.ne.s32.totalorder %s226, %s240
      %p242 = scmp.eq.s32.totalorder %s27, 0
      %p243 = por %p241, %p242
      %s245 = sadd.s32 %s244, 1
      %p248 = scmp.eq.s32.totalorder %s21, 1
      %p249 = scmp.ne.s32.totalorder %s244, %s246
      %p250 = scmp.eq.s32.totalorder %s21, 0
      %p251 = por %p249, %p250
      %p252 = scmp.ne.s32.totalorder %s244, %s246
      %p253 = scmp.eq.s32.totalorder %s26, 1
      %p254 = por %p252, %p253
      %p255 = scmp.ne.s32.totalorder %s246, %s247
      %p256 = scmp.eq.s32.totalorder %s26, 0
      %p257 = por %p255, %p256
      %p258 = scmp.ne.s32.totalorder %s246, %s247
      %p259 = scmp.eq.s32.totalorder %s27, 1
      %p260 = por %p258, %p259
      %p262 = scmp.ne.s32.totalorder %s247, %s261
      %p263 = scmp.eq.s32.totalorder %s27, 0
      %p264 = por %p262, %p263
      %s266 = sadd.s32 %s265, 1
      %p269 = scmp.eq.s32.totalorder %s21, 1
      %p270 = scmp.ne.s32.totalorder %s265, %s267
      %p271 = scmp.eq.s32.totalorder %s21, 0
      %p272 = por %p270, %p271
      %p273 = scmp.ne.s32.totalorder %s265, %s267
      %p274 = scmp.eq.s32.totalorder %s26, 1
      %p275 = por %p273, %p274
      %p276 = scmp.ne.s32.totalorder %s267, %s268
      %p277 = scmp.eq.s32.totalorder %s26, 0
      %p278 = por %p276, %p277
      %p279 = scmp.ne.s32.totalorder %s267, %s268
      %p280 = scmp.eq.s32.totalorder %s27, 1
      %p281 = por %p279, %p280
      %p283 = scmp.ne.s32.totalorder %s268, %s282
      %p284 = scmp.eq.s32.totalorder %s27, 0
      %p285 = por %p283, %p284
      %s286 = ssub.s32 %s21, %s28
      %p287 = scmp.eq.s32.totalorder %s286, 0
      %s289 = sadd.s32 %s288, 1
      %s290 = scalar_select %p287, %s288, %s289
      %p293 = pneg %p287
      %p294 = scmp.eq.s32.totalorder %s21, 1
      %p295 = por %p293, %p294
      %p296 = scmp.ne.s32.totalorder %s288, %s291
      %p297 = scmp.eq.s32.totalorder %s21, 0
      %p298 = por %p296, %p297
      %p299 = scmp.ne.s32.totalorder %s288, %s291
      %p300 = scmp.eq.s32.totalorder %s26, 1
      %p301 = por %p299, %p300
      %p302 = scmp.ne.s32.totalorder %s291, %s292
      %p303 = scmp.eq.s32.totalorder %s26, 0
      %p304 = por %p302, %p303
      %p305 = scmp.ne.s32.totalorder %s291, %s292
      %p306 = scmp.eq.s32.totalorder %s27, 1
      %p307 = por %p305, %p306
      %p309 = scmp.ne.s32.totalorder %s292, %s308
      %p310 = scmp.eq.s32.totalorder %s27, 0
      %p311 = por %p309, %p310
      %p312 = scmp.le.s32.totalorder 1, %s21
      %p313 = scmp.lt.s32.totalorder %s21, 3
      %p314 = pnand %p312, %p313
      %p315 = pneg %p314
      // Predicated region
      $region9: #{tpu_custom_call.1} parent=5 // pred_check
        _
      $region10: #{tpu_custom_call.1} parent=5 // pred_check_branch
        %317 = sbr.rel (%p314) target = $region12
      $region11: #{tpu_custom_call.1} parent=5 // pred_region
        %s318 = ssub.s32 %s21, 1
        // Predicated region
        $region13: #{tpu_custom_call.1} parent=11 // pred_check
          %p319 = pneg %p68
        $region14: #{tpu_custom_call.1} parent=11 // pred_check_branch
          %321 = sbr.rel (%p319) target = $region16
        $region15: #{tpu_custom_call.1} parent=11 // pred_region
          _
        $region16: #{tpu_custom_call.1} parent=11 // pred_fallthru
          _
        // Predicated region
        $region17: #{tpu_custom_call.1} parent=11 // pred_check
          %p322 = pneg %p89
        $region18: #{tpu_custom_call.1} parent=11 // pred_check_branch
          %324 = sbr.rel (%p322) target = $region20
        $region19: #{tpu_custom_call.1} parent=11 // pred_region
          _
        $region20: #{tpu_custom_call.1} parent=11 // pred_fallthru
          _
        // Predicated region
        $region21: #{tpu_custom_call.1} parent=11 // pred_check
          %p325 = pneg %p110
        $region22: #{tpu_custom_call.1} parent=11 // pred_check_branch
          %327 = sbr.rel (%p325) target = $region24
        $region23: #{tpu_custom_call.1} parent=11 // pred_region
          _
        $region24: #{tpu_custom_call.1} parent=11 // pred_fallthru
          _
        // Predicated region
        $region25: #{tpu_custom_call.1} parent=11 // pred_check
          %p328 = pneg %p131
        $region26: #{tpu_custom_call.1} parent=11 // pred_check_branch
          %330 = sbr.rel (%p328) target = $region28
        $region27: #{tpu_custom_call.1} parent=11 // pred_region
          _
        $region28: #{tpu_custom_call.1} parent=11 // pred_fallthru
          _
        // Predicated region
        $region29: #{tpu_custom_call.1} parent=11 // pred_check
          %p331 = pneg %p152
        $region30: #{tpu_custom_call.1} parent=11 // pred_check_branch
          %333 = sbr.rel (%p331) target = $region32
        $region31: #{tpu_custom_call.1} parent=11 // pred_region
          _
        $region32: #{tpu_custom_call.1} parent=11 // pred_fallthru
          _
        // Predicated region
        $region33: #{tpu_custom_call.1} parent=11 // pred_check
          %p334 = pneg %p173
        $region34: #{tpu_custom_call.1} parent=11 // pred_check_branch
          %336 = sbr.rel (%p334) target = $region36
        $region35: #{tpu_custom_call.1} parent=11 // pred_region
          _
        $region36: #{tpu_custom_call.1} parent=11 // pred_fallthru
          _
        // Predicated region
        $region37: #{tpu_custom_call.1} parent=11 // pred_check
          %p337 = pneg %p194
        $region38: #{tpu_custom_call.1} parent=11 // pred_check_branch
          %339 = sbr.rel (%p337) target = $region40
        $region39: #{tpu_custom_call.1} parent=11 // pred_region
          _
        $region40: #{tpu_custom_call.1} parent=11 // pred_fallthru
          _
        // Predicated region
        $region41: #{tpu_custom_call.1} parent=11 // pred_check
          %p340 = pneg %p215
        $region42: #{tpu_custom_call.1} parent=11 // pred_check_branch
          %342 = sbr.rel (%p340) target = $region44
        $region43: #{tpu_custom_call.1} parent=11 // pred_region
          _
        $region44: #{tpu_custom_call.1} parent=11 // pred_fallthru
          _
        // Predicated region
        $region45: #{tpu_custom_call.1} parent=11 // pred_check
          %p343 = pneg %p236
        $region46: #{tpu_custom_call.1} parent=11 // pred_check_branch
          %345 = sbr.rel (%p343) target = $region48
        $region47: #{tpu_custom_call.1} parent=11 // pred_region
          _
        $region48: #{tpu_custom_call.1} parent=11 // pred_fallthru
          _
        // Predicated region
        $region49: #{tpu_custom_call.1} parent=11 // pred_check
          %p346 = pneg %p257
        $region50: #{tpu_custom_call.1} parent=11 // pred_check_branch
          %348 = sbr.rel (%p346) target = $region52
        $region51: #{tpu_custom_call.1} parent=11 // pred_region
          _
        $region52: #{tpu_custom_call.1} parent=11 // pred_fallthru
          _
        // Predicated region
        $region53: #{tpu_custom_call.1} parent=11 // pred_check
          %p349 = pneg %p278
        $region54: #{tpu_custom_call.1} parent=11 // pred_check_branch
          %351 = sbr.rel (%p349) target = $region56
        $region55: #{tpu_custom_call.1} parent=11 // pred_region
          _
        $region56: #{tpu_custom_call.1} parent=11 // pred_fallthru
          _
      $region12: #{tpu_custom_call.1} parent=5 // pred_fallthru
        _
      %p352 = scmp.lt.s32.totalorder %s21, 2
      // Predicated region
      $region57: #{tpu_custom_call.1} parent=5 // pred_check
        %p353 = pneg %p352
      $region58: #{tpu_custom_call.1} parent=5 // pred_check_branch
        %355 = sbr.rel (%p353) target = $region60
      $region59: #{tpu_custom_call.1} parent=5 // pred_region
        // Predicated region
        $region61: #{tpu_custom_call.1} parent=59 // pred_check
          %p356 = pneg %p41
        $region62: #{tpu_custom_call.1} parent=59 // pred_check_branch
          %358 = sbr.rel (%p356) target = $region64
        $region63: #{tpu_custom_call.1} parent=59 // pred_region
          %p359 = scmp.lt.s32.totalorder %s21, 1
          %s360 = scalar_select %p359, %s21, 1
          %s361 = smul.addr %s360, 8
          %s362 = scalar_lea.vmem %s0, %s361
        $region64: #{tpu_custom_call.1} parent=59 // pred_fallthru
          _
      $region60: #{tpu_custom_call.1} parent=5 // pred_fallthru
        _
      %p363 = scmp.le.s32.totalorder 1, %s21
      %p364 = scmp.lt.s32.totalorder %s21, 3
      %p365 = pnand %p363, %p364
      %p366 = pneg %p365
      // Predicated region
      $region65: #{tpu_custom_call.1} parent=5 // pred_check
        _
      $region66: #{tpu_custom_call.1} parent=5 // pred_check_branch
        %368 = sbr.rel (%p365) target = $region68
      $region67: #{tpu_custom_call.1} parent=5 // pred_region
        %s369 = ssub.s32 %s21, 1
        %p370 = scmp.lt.s32.totalorder %s26, 1
        %s371 = scalar_select %p370, %s26, 1
        %s372 = smul.addr %s371, 8
        %s373 = scalar_lea.vmem %s0, %s372
        %p374 = pneg %p47
        %p375 = pneg %p44
        %p376 = pneg %p68
        %p377 = pneg %p65
        %p378 = pneg %p89
        %p379 = pneg %p86
        %p380 = pneg %p110
        %p381 = pneg %p107
        %p382 = pneg %p131
        %p383 = pneg %p128
        %p384 = pneg %p152
        %p385 = pneg %p149
        %p386 = pneg %p173
        %p387 = pneg %p170
        %p388 = pneg %p194
        %p389 = pneg %p191
        %p390 = pneg %p215
        %p391 = pneg %p212
        %p392 = pneg %p236
        %p393 = pneg %p233
        %p394 = pneg %p257
        %p395 = pneg %p254
        %p396 = pneg %p278
        %p397 = pneg %p275
        %p398 = pneg %p304
        %p399 = pneg %p301
        %s400 = sand.u32 %s291, 1
        %s401 = scalar_lea.sflag [#allocation4], %s400
        %s402 = sand.u32 %s291, 1
        %s403 = smul.addr %s402, 8
        %s404 = scalar_lea.vmem [#allocation3], %s403
        %p405 = scmp.lt.s32.totalorder %s26, 1
        %s406 = scalar_select %p405, %s26, 1
        %s407 = smul.addr %s406, 8
        %s408 = scalar_lea.vmem %s0, %s407
        %v410 = vld [vmem:[%s408] sm:$0xff]
        %v411 = vld [vmem:[%s1] sm:$0x1]
        %v412 = vld [vmem:[%s2] sm:$0x1]
        %vm413 = vcmask 261120
        %v414 = vsel %vm413, %v410, 0.0
        %415 = vadd.xlane.f32.xlu0 %v414
        %v416 = vpop.xlane.xlu0 %415
        %v417 = vrcp.pop 32.0
        %v418 = vmul.f32 %v416, %v417
        %v419 = vsub.f32 %v410, %v418
        %v420 = vmul.f32 %v419, %v419
        %v421 = vsel %vm413, %v420, 0.0
        %422 = vadd.xlane.f32.xlu0 %v421
        %v423 = vpop.xlane.xlu0 %422
        %v424 = vmul.f32 %v423, %v417
        %v425 = vadd.f32 %v424, 1e-05
        %v426 = vrsqrt.pop %v425
        %v427 = vmul.f32 %v419, %v426
        %v429 = vlaneseq
        %v430 = vshrl.u32 %v429, 7
        %v431 = vsub.s32 0, %v430
        %v432 = vrot.slane %v411, %v431
        %v434 = vmul.f32 %v427, %v432
        %v436 = vlaneseq
        %v437 = vshrl.u32 %v436, 7
        %v438 = vsub.s32 0, %v437
        %v439 = vrot.slane %v412, %v438
        %v441 = vadd.f32 %v434, %v439
        %v442 = vpack.c.bf16 %v441, %v441
        %v443 = vld [vmem:[%s3] sm:$0xf]
        %v444 = vld [vmem:[%s3 + $0x4] sm:$0xf]
        %v445 = vld [vmem:[%s3 + $0x8] sm:$0xf]
        %v446 = vld [vmem:[%s3 + $0xc] sm:$0xf]
        %v451 = vunpack.c.l.b16 %v443
        %v452 = vunpack.c.l.b16 %v444
        %v453 = vunpack.c.l.b16 %v445
        %v454 = vunpack.c.l.b16 %v446
        %v455 = vpack.c.b16 %v452, %v451
        %v456 = vpack.c.b16 %v454, %v453
        %v460 = vsel %vm413, %v442, 0
        %462 = vmatprep.subr.bf16.mxu0 0
        %463 = vmatpush1.bf16.msra.mxu0 %v455
        %464 = vmatprep.subr.bf16.mxu0 0
        %465 = vmatpush1.bf16.msra.mxu0 %v456
        %466 = vmatprep.subr.bf16.mxu0 0
        %467 = vmatpush1.bf16.msra.mxu0 0
        %468 = vmatprep.subr.bf16.mxu0 0
        %469 = vmatpush1.bf16.msra.mxu0 0
        %470 = vmatprep.subr.bf16.mxu0 0
        %471 = vmatpush1.bf16.msra.mxu0 0
        %472 = vmatprep.subr.bf16.mxu0 0
        %473 = vmatpush1.bf16.msra.mxu0 0
        %474 = vmatprep.subr.bf16.mxu0 0
        %475 = vmatpush1.bf16.msra.mxu0 0
        %476 = vmatprep.subr.bf16.mxu0 0
        %477 = vmatpush1.bf16.msra.mxu0 0
        %478 = vmatprep.subr.bf16.mxu0 0
        %479 = vmatpush1.bf16.msra.mxu0 0
        %480 = vmatprep.subr.bf16.mxu0 0
        %481 = vmatpush1.bf16.msra.mxu0 0
        %482 = vmatprep.subr.bf16.mxu0 0
        %483 = vmatpush1.bf16.msra.mxu0 0
        %484 = vmatprep.subr.bf16.mxu0 0
        %485 = vmatpush1.bf16.msra.mxu0 0
        %486 = vmatprep.subr.bf16.mxu0 0
        %487 = vmatpush1.bf16.msra.mxu0 0
        %488 = vmatprep.subr.bf16.mxu0 0
        %489 = vmatpush1.bf16.msra.mxu0 0
        %490 = vmatprep.subr.bf16.mxu0 0
        %491 = vmatpush1.bf16.msra.mxu0 0
        %492 = vmatprep.subr.bf16.mxu0 0
        %493 = vmatpush1.bf16.msra.mxu0 0
        %494 = vmatprep.mubr.bf16.mxu0 0
        %495 = vmatmul.mubr.bf16.gmra.mrb[0].mxu0 %v460
        %v496 = vpop.f32.mrb[0].mxu0
        %v497 = vadd.f32 0.0, %v496
        %v498 = vpop.f32.mrb[0].mxu0
        %v499 = vpop.f32.mrb[0].mxu0
        %v500 = vpop.f32.mrb[0].mxu0
        %501 = vdwg.mxu0
        %v502 = vpack.c.bf16 %v497, %v497
        %vm503 = vcmask 781312
        %504 = vst.msk [vmem:[#allocation2] sm:$0xf] %vm503, %v502
        %v505 = vld [vmem:[#allocation2] sm:$0xf]
        %507 = vrot.lane.b32.xlu0 %v505, 120
        %v508 = vpop.permute.xlu0 %507
        %509 = vrot.lane.b32.xlu0 %v505, 112
        %v510 = vpop.permute.xlu0 %509
        %511 = vrot.lane.b32.xlu0 %v505, 104
        %v512 = vpop.permute.xlu0 %511
        %513 = vrot.lane.b32.xlu0 %v505, 96
        %v514 = vpop.permute.xlu0 %513
        %515 = vrot.lane.b32.xlu0 %v505, 88
        %v516 = vpop.permute.xlu0 %515
        %517 = vrot.lane.b32.xlu0 %v505, 80
        %v518 = vpop.permute.xlu0 %517
        %519 = vrot.lane.b32.xlu0 %v505, 72
        %v520 = vpop.permute.xlu0 %519
        %521 = vrot.lane.b32.xlu0 %v505, 64
        %v522 = vpop.permute.xlu0 %521
        %523 = vrot.lane.b32.xlu0 %v505, 56
        %v524 = vpop.permute.xlu0 %523
        %525 = vrot.lane.b32.xlu0 %v505, 48
        %v526 = vpop.permute.xlu0 %525
        %527 = vrot.lane.b32.xlu0 %v505, 40
        %v528 = vpop.permute.xlu0 %527
        %v531 = vpack.i.b16 %v508, %v505
        %v533 = vshrl.u32 %v505, 16
        %v534 = vshrl.u32 %v508, 16
        %v535 = vpack.i.b16 %v534, %v533
        %v539 = vpack.i.b16 %v512, %v510
        %v541 = vshrl.u32 %v510, 16
        %v542 = vshrl.u32 %v512, 16
        %v543 = vpack.i.b16 %v542, %v541
        %v547 = vpack.i.b16 %v516, %v514
        %v549 = vshrl.u32 %v514, 16
        %v550 = vshrl.u32 %v516, 16
        %v551 = vpack.i.b16 %v550, %v549
        %v555 = vpack.i.b16 %v520, %v518
        %v557 = vshrl.u32 %v518, 16
        %v558 = vshrl.u32 %v520, 16
        %v559 = vpack.i.b16 %v558, %v557
        %v563 = vpack.i.b16 %v524, %v522
        %v564 = vshrl.u32 %v522, 16
        %v565 = vshrl.u32 %v524, 16
        %v566 = vpack.i.b16 %v565, %v564
        %v569 = vpack.i.b16 %v528, %v526
        %v570 = vshrl.u32 %v526, 16
        %v571 = vshrl.u32 %v528, 16
        %v572 = vpack.i.b16 %v571, %v570
        %v573 = vcombine.low %v531, %v547
        %v575 = vunpack.c.l.s4 1983009808
        %v576 = vunpack.c.0.s8 %v575
        %v577 = vlaneseq
        %v578 = vshrl.u32 %v577, 7
        %v579 = vsub.s32 %v576, %v578
        %v580 = vrot.slane %v573, %v579
        %v581 = vcombine.low %v539, %v555
        %v583 = vunpack.c.l.s4 1983009808
        %v584 = vunpack.c.0.s8 %v583
        %v585 = vlaneseq
        %v586 = vshrl.u32 %v585, 7
        %v587 = vsub.s32 %v584, %v586
        %v588 = vrot.slane %v581, %v587
        %v589 = vcombine.low %v580, %v588
        %v590 = vcombine.high %v580, %v588
        %v592 = vunpack.c.l.s4 1934713408
        %v593 = vunpack.c.0.s8 %v592
        %v594 = vlaneseq
        %v595 = vshrl.u32 %v594, 7
        %v596 = vsub.s32 %v593, %v595
        %v597 = vrot.slane %v589, %v596
        %v599 = vunpack.c.l.s4 1934713408
        %v600 = vunpack.c.0.s8 %v599
        %v601 = vlaneseq
        %v602 = vshrl.u32 %v601, 7
        %v603 = vsub.s32 %v600, %v602
        %v604 = vrot.slane %v590, %v603
        %v605 = vcombine.high %v597, 0
        %v606 = vcombine.high %v604, 0
        %v607 = vcombine.low %v535, %v551
        %v609 = vunpack.c.l.s4 1983009808
        %v610 = vunpack.c.0.s8 %v609
        %v611 = vlaneseq
        %v612 = vshrl.u32 %v611, 7
        %v613 = vsub.s32 %v610, %v612
        %v614 = vrot.slane %v607, %v613
        %v615 = vcombine.low %v543, %v559
        %v617 = vunpack.c.l.s4 1983009808
        %v618 = vunpack.c.0.s8 %v617
        %v619 = vlaneseq
        %v620 = vshrl.u32 %v619, 7
        %v621 = vsub.s32 %v618, %v620
        %v622 = vrot.slane %v615, %v621
        %v623 = vcombine.low %v614, %v622
        %v624 = vcombine.high %v614, %v622
        %v626 = vunpack.c.l.s4 1934713408
        %v627 = vunpack.c.0.s8 %v626
        %v628 = vlaneseq
        %v629 = vshrl.u32 %v628, 7
        %v630 = vsub.s32 %v627, %v629
        %v631 = vrot.slane %v623, %v630
        %v633 = vunpack.c.l.s4 1934713408
        %v634 = vunpack.c.0.s8 %v633
        %v635 = vlaneseq
        %v636 = vshrl.u32 %v635, 7
        %v637 = vsub.s32 %v634, %v636
        %v638 = vrot.slane %v624, %v637
        %v639 = vcombine.high %v631, 0
        %v640 = vcombine.high %v638, 0
        %v643 = vunpack.c.l.s4 1983009808
        %v644 = vunpack.c.0.s8 %v643
        %v645 = vlaneseq
        %v646 = vshrl.u32 %v645, 7
        %v647 = vsub.s32 %v644, %v646
        %v648 = vrot.slane %v563, %v647
        %v651 = vunpack.c.l.s4 1983009808
        %v652 = vunpack.c.0.s8 %v651
        %v653 = vlaneseq
        %v654 = vshrl.u32 %v653, 7
        %v655 = vsub.s32 %v652, %v654
        %v656 = vrot.slane %v569, %v655
        %v657 = vcombine.low %v648, %v656
        %v658 = vcombine.high %v648, %v656
        %v660 = vunpack.c.l.s4 1934713408
        %v661 = vunpack.c.0.s8 %v660
        %v662 = vlaneseq
        %v663 = vshrl.u32 %v662, 7
        %v664 = vsub.s32 %v661, %v663
        %v665 = vrot.slane %v657, %v664
        %v667 = vunpack.c.l.s4 1934713408
        %v668 = vunpack.c.0.s8 %v667
        %v669 = vlaneseq
        %v670 = vshrl.u32 %v669, 7
        %v671 = vsub.s32 %v668, %v670
        %v672 = vrot.slane %v658, %v671
        %v673 = vcombine.high %v665, 0
        %v674 = vcombine.high %v672, 0
        %v677 = vunpack.c.l.s4 1983009808
        %v678 = vunpack.c.0.s8 %v677
        %v679 = vlaneseq
        %v680 = vshrl.u32 %v679, 7
        %v681 = vsub.s32 %v678, %v680
        %v682 = vrot.slane %v566, %v681
        %v685 = vunpack.c.l.s4 1983009808
        %v686 = vunpack.c.0.s8 %v685
        %v687 = vlaneseq
        %v688 = vshrl.u32 %v687, 7
        %v689 = vsub.s32 %v686, %v688
        %v690 = vrot.slane %v572, %v689
        %v691 = vcombine.low %v682, %v690
        %v692 = vcombine.high %v682, %v690
        %v694 = vunpack.c.l.s4 1934713408
        %v695 = vunpack.c.0.s8 %v694
        %v696 = vlaneseq
        %v697 = vshrl.u32 %v696, 7
        %v698 = vsub.s32 %v695, %v697
        %v699 = vrot.slane %v691, %v698
        %v701 = vunpack.c.l.s4 1934713408
        %v702 = vunpack.c.0.s8 %v701
        %v703 = vlaneseq
        %v704 = vshrl.u32 %v703, 7
        %v705 = vsub.s32 %v702, %v704
        %v706 = vrot.slane %v692, %v705
        %v707 = vcombine.high %v699, 0
        %v708 = vcombine.high %v706, 0
        %v709 = vcombine.low %v597, %v604
        %v711 = vunpack.c.l.s4 1983009808
        %v712 = vunpack.c.0.s8 %v711
        %v713 = vlaneseq
        %v714 = vshrl.u32 %v713, 7
        %v715 = vsub.s32 %v712, %v714
        %v716 = vrot.slane %v709, %v715
        %v717 = vcombine.low %v605, %v606
        %v719 = vunpack.c.l.s4 1983009808
        %v720 = vunpack.c.0.s8 %v719
        %v721 = vlaneseq
        %v722 = vshrl.u32 %v721, 7
        %v723 = vsub.s32 %v720, %v722
        %v724 = vrot.slane %v717, %v723
        %v725 = vcombine.low %v716, %v724
        %v726 = vcombine.high %v716, %v724
        %v728 = vunpack.c.l.s4 1934713408
        %v729 = vunpack.c.0.s8 %v728
        %v730 = vlaneseq
        %v731 = vshrl.u32 %v730, 7
        %v732 = vsub.s32 %v729, %v731
        %v733 = vrot.slane %v725, %v732
        %v735 = vunpack.c.l.s4 1934713408
        %v736 = vunpack.c.0.s8 %v735
        %v737 = vlaneseq
        %v738 = vshrl.u32 %v737, 7
        %v739 = vsub.s32 %v736, %v738
        %v740 = vrot.slane %v726, %v739
        %v741 = vcombine.high %v733, 0
        %v742 = vcombine.high %v740, 0
        %v743 = vcombine.low %v631, %v638
        %v745 = vunpack.c.l.s4 1983009808
        %v746 = vunpack.c.0.s8 %v745
        %v747 = vlaneseq
        %v748 = vshrl.u32 %v747, 7
        %v749 = vsub.s32 %v746, %v748
        %v750 = vrot.slane %v743, %v749
        %v751 = vcombine.low %v639, %v640
        %v753 = vunpack.c.l.s4 1983009808
        %v754 = vunpack.c.0.s8 %v753
        %v755 = vlaneseq
        %v756 = vshrl.u32 %v755, 7
        %v757 = vsub.s32 %v754, %v756
        %v758 = vrot.slane %v751, %v757
        %v759 = vcombine.low %v750, %v758
        %v760 = vcombine.high %v750, %v758
        %v762 = vunpack.c.l.s4 1934713408
        %v763 = vunpack.c.0.s8 %v762
        %v764 = vlaneseq
        %v765 = vshrl.u32 %v764, 7
        %v766 = vsub.s32 %v763, %v765
        %v767 = vrot.slane %v759, %v766
        %v769 = vunpack.c.l.s4 1934713408
        %v770 = vunpack.c.0.s8 %v769
        %v771 = vlaneseq
        %v772 = vshrl.u32 %v771, 7
        %v773 = vsub.s32 %v770, %v772
        %v774 = vrot.slane %v760, %v773
        %v775 = vcombine.high %v767, 0
        %v776 = vcombine.high %v774, 0
        %v777 = vcombine.low %v665, %v672
        %v779 = vunpack.c.l.s4 1983009808
        %v780 = vunpack.c.0.s8 %v779
        %v781 = vlaneseq
        %v782 = vshrl.u32 %v781, 7
        %v783 = vsub.s32 %v780, %v782
        %v784 = vrot.slane %v777, %v783
        %v785 = vcombine.low %v673, %v674
        %v787 = vunpack.c.l.s4 1983009808
        %v788 = vunpack.c.0.s8 %v787
        %v789 = vlaneseq
        %v790 = vshrl.u32 %v789, 7
        %v791 = vsub.s32 %v788, %v790
        %v792 = vrot.slane %v785, %v791
        %v793 = vcombine.low %v784, %v792
        %v795 = vunpack.c.l.s4 1934713408
        %v796 = vunpack.c.0.s8 %v795
        %v797 = vlaneseq
        %v798 = vshrl.u32 %v797, 7
        %v799 = vsub.s32 %v796, %v798
        %v800 = vrot.slane %v793, %v799
        %v801 = vcombine.high %v800, 0
        %v802 = vcombine.low %v699, %v706
        %v804 = vunpack.c.l.s4 1983009808
        %v805 = vunpack.c.0.s8 %v804
        %v806 = vlaneseq
        %v807 = vshrl.u32 %v806, 7
        %v808 = vsub.s32 %v805, %v807
        %v809 = vrot.slane %v802, %v808
        %v810 = vcombine.low %v707, %v708
        %v812 = vunpack.c.l.s4 1983009808
        %v813 = vunpack.c.0.s8 %v812
        %v814 = vlaneseq
        %v815 = vshrl.u32 %v814, 7
        %v816 = vsub.s32 %v813, %v815
        %v817 = vrot.slane %v810, %v816
        %v818 = vcombine.low %v809, %v817
        %v820 = vunpack.c.l.s4 1934713408
        %v821 = vunpack.c.0.s8 %v820
        %v822 = vlaneseq
        %v823 = vshrl.u32 %v822, 7
        %v824 = vsub.s32 %v821, %v823
        %v825 = vrot.slane %v818, %v824
        %v826 = vcombine.high %v825, 0
        %v829 = vpack.i.b16 %v767, %v733
        %v830 = vshrl.u32 %v733, 16
        %v831 = vshrl.u32 %v767, 16
        %v832 = vpack.i.b16 %v831, %v830
        %v835 = vpack.i.b16 %v775, %v741
        %v836 = vshrl.u32 %v741, 16
        %v837 = vshrl.u32 %v775, 16
        %v838 = vpack.i.b16 %v837, %v836
        %v841 = vpack.i.b16 %v774, %v740
        %v842 = vshrl.u32 %v740, 16
        %v843 = vshrl.u32 %v774, 16
        %v844 = vpack.i.b16 %v843, %v842
        %v847 = vpack.i.b16 %v776, %v742
        %v848 = vshrl.u32 %v742, 16
        %v849 = vshrl.u32 %v776, 16
        %v850 = vpack.i.b16 %v849, %v848
        %v853 = vpack.i.b16 %v825, %v800
        %v854 = vshrl.u32 %v800, 16
        %v855 = vshrl.u32 %v825, 16
        %v856 = vpack.i.b16 %v855, %v854
        %v859 = vpack.i.b16 %v826, %v801
        %v860 = vshrl.u32 %v801, 16
        %v861 = vshrl.u32 %v826, 16
        %v862 = vpack.i.b16 %v861, %v860
        %v863 = vlaneseq
        %v864 = vshrl.u32 %v863, 7
        %v865 = vlaneseq
        %v866 = vand.u32 %v865, 127
        %vm867 = vcmp.le.s32.totalorder %v866, %v864
        %v868 = vsel %vm867, 0.0, -1e+30
        %vm869 = vcmask 64512
        %v871 = vsel %vm869, %v829, 0
        %v874 = vsel %vm869, %v841, 0
        %876 = vmatprep.subr.bf16.mxu0 0
        %877 = vmatpush1.bf16.xpose.msra.mxu0 %v874
        %878 = vmatprep.subr.bf16.mxu0 0
        %879 = vmatpush1.bf16.xpose.msra.mxu0 0
        %880 = vmatprep.subr.bf16.mxu0 0
        %881 = vmatpush1.bf16.xpose.msra.mxu0 0
        %882 = vmatprep.subr.bf16.mxu0 0
        %883 = vmatpush1.bf16.xpose.msra.mxu0 0
        %884 = vmatprep.subr.bf16.mxu0 0
        %885 = vmatpush1.bf16.xpose.msra.mxu0 0
        %886 = vmatprep.subr.bf16.mxu0 0
        %887 = vmatpush1.bf16.xpose.msra.mxu0 0
        %888 = vmatprep.subr.bf16.mxu0 0
        %889 = vmatpush1.bf16.xpose.msra.mxu0 0
        %890 = vmatprep.subr.bf16.mxu0 0
        %891 = vmatpush1.bf16.xpose.msra.mxu0 0
        %892 = vmatprep.subr.bf16.mxu0 0
        %893 = vmatpush1.bf16.xpose.msra.mxu0 0
        %894 = vmatprep.subr.bf16.mxu0 0
        %895 = vmatpush1.bf16.xpose.msra.mxu0 0
        %896 = vmatprep.subr.bf16.mxu0 0
        %897 = vmatpush1.bf16.xpose.msra.mxu0 0
        %898 = vmatprep.subr.bf16.mxu0 0
        %899 = vmatpush1.bf16.xpose.msra.mxu0 0
        %900 = vmatprep.subr.bf16.mxu0 0
        %901 = vmatpush1.bf16.xpose.msra.mxu0 0
        %902 = vmatprep.subr.bf16.mxu0 0
        %903 = vmatpush1.bf16.xpose.msra.mxu0 0
        %904 = vmatprep.subr.bf16.mxu0 0
        %905 = vmatpush1.bf16.xpose.msra.mxu0 0
        %906 = vmatprep.subr.bf16.mxu0 0
        %907 = vmatpush1.bf16.xpose.msra.mxu0 0
        %908 = vmatprep.mubr.bf16.mxu0 0
        %909 = vmatmul.mubr.bf16.gmra.mrb[0].mxu0 %v871
        %v910 = vpop.f32.mrb[0].mxu0
        %v911 = vadd.f32 %v868, %v910
        %v912 = vpop.f32.mrb[0].mxu0
        %v913 = vpop.f32.mrb[0].mxu0
        %v914 = vpop.f32.mrb[0].mxu0
        %915 = vdwg.mxu0
        %v917 = vsel %vm869, %v832, 0
        %v920 = vsel %vm869, %v844, 0
        %922 = vmatprep.subr.bf16.mxu0 0
        %923 = vmatpush1.bf16.xpose.msra.mxu0 %v920
        %924 = vmatprep.subr.bf16.mxu0 0
        %925 = vmatpush1.bf16.xpose.msra.mxu0 0
        %926 = vmatprep.subr.bf16.mxu0 0
        %927 = vmatpush1.bf16.xpose.msra.mxu0 0
        %928 = vmatprep.subr.bf16.mxu0 0
        %929 = vmatpush1.bf16.xpose.msra.mxu0 0
        %930 = vmatprep.subr.bf16.mxu0 0
        %931 = vmatpush1.bf16.xpose.msra.mxu0 0
        %932 = vmatprep.subr.bf16.mxu0 0
        %933 = vmatpush1.bf16.xpose.msra.mxu0 0
        %934 = vmatprep.subr.bf16.mxu0 0
        %935 = vmatpush1.bf16.xpose.msra.mxu0 0
        %936 = vmatprep.subr.bf16.mxu0 0
        %937 = vmatpush1.bf16.xpose.msra.mxu0 0
        %938 = vmatprep.subr.bf16.mxu0 0
        %939 = vmatpush1.bf16.xpose.msra.mxu0 0
        %940 = vmatprep.subr.bf16.mxu0 0
        %941 = vmatpush1.bf16.xpose.msra.mxu0 0
        %942 = vmatprep.subr.bf16.mxu0 0
        %943 = vmatpush1.bf16.xpose.msra.mxu0 0
        %944 = vmatprep.subr.bf16.mxu0 0
        %945 = vmatpush1.bf16.xpose.msra.mxu0 0
        %946 = vmatprep.subr.bf16.mxu0 0
        %947 = vmatpush1.bf16.xpose.msra.mxu0 0
        %948 = vmatprep.subr.bf16.mxu0 0
        %949 = vmatpush1.bf16.xpose.msra.mxu0 0
        %950 = vmatprep.subr.bf16.mxu0 0
        %951 = vmatpush1.bf16.xpose.msra.mxu0 0
        %952 = vmatprep.subr.bf16.mxu0 0
        %953 = vmatpush1.bf16.xpose.msra.mxu0 0
        %954 = vmatprep.mubr.bf16.mxu0 0
        %955 = vmatmul.mubr.bf16.gmra.mrb[0].mxu0 %v917
        %v956 = vpop.f32.mrb[0].mxu0
        %v957 = vadd.f32 %v868, %v956
        %v958 = vpop.f32.mrb[0].mxu0
        %v959 = vpop.f32.mrb[0].mxu0
        %v960 = vpop.f32.mrb[0].mxu0
        %961 = vdwg.mxu0
        %v963 = vsel %vm869, %v835, 0
        %v966 = vsel %vm869, %v847, 0
        %968 = vmatprep.subr.bf16.mxu0 0
        %969 = vmatpush1.bf16.xpose.msra.mxu0 %v966
        %970 = vmatprep.subr.bf16.mxu0 0
        %971 = vmatpush1.bf16.xpose.msra.mxu0 0
        %972 = vmatprep.subr.bf16.mxu0 0
        %973 = vmatpush1.bf16.xpose.msra.mxu0 0
        %974 = vmatprep.subr.bf16.mxu0 0
        %975 = vmatpush1.bf16.xpose.msra.mxu0 0
        %976 = vmatprep.subr.bf16.mxu0 0
        %977 = vmatpush1.bf16.xpose.msra.mxu0 0
        %978 = vmatprep.subr.bf16.mxu0 0
        %979 = vmatpush1.bf16.xpose.msra.mxu0 0
        %980 = vmatprep.subr.bf16.mxu0 0
        %981 = vmatpush1.bf16.xpose.msra.mxu0 0
        %982 = vmatprep.subr.bf16.mxu0 0
        %983 = vmatpush1.bf16.xpose.msra.mxu0 0
        %984 = vmatprep.subr.bf16.mxu0 0
        %985 = vmatpush1.bf16.xpose.msra.mxu0 0
        %986 = vmatprep.subr.bf16.mxu0 0
        %987 = vmatpush1.bf16.xpose.msra.mxu0 0
        %988 = vmatprep.subr.bf16.mxu0 0
        %989 = vmatpush1.bf16.xpose.msra.mxu0 0
        %990 = vmatprep.subr.bf16.mxu0 0
        %991 = vmatpush1.bf16.xpose.msra.mxu0 0
        %992 = vmatprep.subr.bf16.mxu0 0
        %993 = vmatpush1.bf16.xpose.msra.mxu0 0
        %994 = vmatprep.subr.bf16.mxu0 0
        %995 = vmatpush1.bf16.xpose.msra.mxu0 0
        %996 = vmatprep.subr.bf16.mxu0 0
        %997 = vmatpush1.bf16.xpose.msra.mxu0 0
        %998 = vmatprep.subr.bf16.mxu0 0
        %999 = vmatpush1.bf16.xpose.msra.mxu0 0
        %1000 = vmatprep.mubr.bf16.mxu0 0
        %1001 = vmatmul.mubr.bf16.gmra.mrb[0].mxu0 %v963
        %v1002 = vpop.f32.mrb[0].mxu0
        %v1003 = vadd.f32 %v868, %v1002
        %v1004 = vpop.f32.mrb[0].mxu0
        %v1005 = vpop.f32.mrb[0].mxu0
        %v1006 = vpop.f32.mrb[0].mxu0
        %1007 = vdwg.mxu0
        %v1009 = vsel %vm869, %v838, 0
        %v1012 = vsel %vm869, %v850, 0
        %1014 = vmatprep.subr.bf16.mxu0 0
        %1015 = vmatpush1.bf16.xpose.msra.mxu0 %v1012
        %1016 = vmatprep.subr.bf16.mxu0 0
        %1017 = vmatpush1.bf16.xpose.msra.mxu0 0
        %1018 = vmatprep.subr.bf16.mxu0 0
        %1019 = vmatpush1.bf16.xpose.msra.mxu0 0
        %1020 = vmatprep.subr.bf16.mxu0 0
        %1021 = vmatpush1.bf16.xpose.msra.mxu0 0
        %1022 = vmatprep.subr.bf16.mxu0 0
        %1023 = vmatpush1.bf16.xpose.msra.mxu0 0
        %1024 = vmatprep.subr.bf16.mxu0 0
        %1025 = vmatpush1.bf16.xpose.msra.mxu0 0
        %1026 = vmatprep.subr.bf16.mxu0 0
        %1027 = vmatpush1.bf16.xpose.msra.mxu0 0
        %1028 = vmatprep.subr.bf16.mxu0 0
        %1029 = vmatpush1.bf16.xpose.msra.mxu0 0
        %1030 = vmatprep.subr.bf16.mxu0 0
        %1031 = vmatpush1.bf16.xpose.msra.mxu0 0
        %1032 = vmatprep.subr.bf16.mxu0 0
        %1033 = vmatpush1.bf16.xpose.msra.mxu0 0
        %1034 = vmatprep.subr.bf16.mxu0 0
        %1035 = vmatpush1.bf16.xpose.msra.mxu0 0
        %1036 = vmatprep.subr.bf16.mxu0 0
        %1037 = vmatpush1.bf16.xpose.msra.mxu0 0
        %1038 = vmatprep.subr.bf16.mxu0 0
        %1039 = vmatpush1.bf16.xpose.msra.mxu0 0
        %1040 = vmatprep.subr.bf16.mxu0 0
        %1041 = vmatpush1.bf16.xpose.msra.mxu0 0
        %1042 = vmatprep.subr.bf16.mxu0 0
        %1043 = vmatpush1.bf16.xpose.msra.mxu0 0
        %1044 = vmatprep.subr.bf16.mxu0 0
        %1045 = vmatpush1.bf16.xpose.msra.mxu0 0
        %1046 = vmatprep.mubr.bf16.mxu0 0
        %1047 = vmatmul.mubr.bf16.gmra.mrb[0].mxu0 %v1009
        %v1048 = vpop.f32.mrb[0].mxu0
        %v1049 = vadd.f32 %v868, %v1048
        %v1050 = vpop.f32.mrb[0].mxu0
        %v1051 = vpop.f32.mrb[0].mxu0
        %v1052 = vpop.f32.mrb[0].mxu0
        %1053 = vdwg.mxu0
        %v1054 = vsel %vm869, %v911, -inf
        %1055 = vmax.xlane.f32.xlu0 %v1054
        %v1056 = vpop.xlane.xlu0 %1055
        %v1057 = vsel %vm869, %v957, -inf
        %1058 = vmax.xlane.f32.xlu0 %v1057
        %v1059 = vpop.xlane.xlu0 %1058
        %v1060 = vsel %vm869, %v1003, -inf
        %1061 = vmax.xlane.f32.xlu0 %v1060
        %v1062 = vpop.xlane.xlu0 %1061
        %v1063 = vsel %vm869, %v1049, -inf
        %1064 = vmax.xlane.f32.xlu0 %v1063
        %v1065 = vpop.xlane.xlu0 %1064
        %v1066 = vsub.f32 %v911, %v1056
        %v1067 = vsub.f32 %v957, %v1059
        %v1068 = vsub.f32 %v1003, %v1062
        %v1069 = vsub.f32 %v1049, %v1065
        %v1070 = vmul.f32 %v1066, 1.442695
        %v1071 = vpow.pop %v1070
        %v1072 = vmul.f32 %v1067, 1.442695
        %v1073 = vpow.pop %v1072
        %v1074 = vmul.f32 %v1068, 1.442695
        %v1075 = vpow.pop %v1074
        %v1076 = vmul.f32 %v1069, 1.442695
        %v1077 = vpow.pop %v1076
        %v1078 = vsel %vm869, %v1071, 0.0
        %1079 = vadd.xlane.f32.xlu0 %v1078
        %v1080 = vpop.xlane.xlu0 %1079
        %v1081 = vsel %vm869, %v1073, 0.0
        %1082 = vadd.xlane.f32.xlu0 %v1081
        %v1083 = vpop.xlane.xlu0 %1082
        %v1084 = vsel %vm869, %v1075, 0.0
        %1085 = vadd.xlane.f32.xlu0 %v1084
        %v1086 = vpop.xlane.xlu0 %1085
        %v1087 = vsel %vm869, %v1077, 0.0
        %1088 = vadd.xlane.f32.xlu0 %v1087
        %v1089 = vpop.xlane.xlu0 %1088
        %v1090 = vrcp.pop %v1080
        %v1091 = vrcp.pop %v1083
        %v1092 = vrcp.pop %v1086
        %v1093 = vrcp.pop %v1089
        %v1094 = vpack.c.bf16 %v1071, %v1071
        %v1095 = vpack.c.bf16 %v1073, %v1073
        %v1096 = vpack.c.bf16 %v1075, %v1075
        %v1097 = vpack.c.bf16 %v1077, %v1077
        %v1099 = vsel %vm869, %v1094, 0
        %vm1101 = vcmask 1043456
        %v1103 = vsel %vm1101, %v853, 0
        %1105 = vmatprep.subr.bf16.mxu0 0
        %1106 = vmatpush1.bf16.msra.mxu0 %v1103
        %1107 = vmatprep.subr.bf16.mxu0 0
        %1108 = vmatpush1.bf16.msra.mxu0 0
        %1109 = vmatprep.subr.bf16.mxu0 0
        %1110 = vmatpush1.bf16.msra.mxu0 0
        %1111 = vmatprep.subr.bf16.mxu0 0
        %1112 = vmatpush1.bf16.msra.mxu0 0
        %1113 = vmatprep.subr.bf16.mxu0 0
        %1114 = vmatpush1.bf16.msra.mxu0 0
        %1115 = vmatprep.subr.bf16.mxu0 0
        %1116 = vmatpush1.bf16.msra.mxu0 0
        %1117 = vmatprep.subr.bf16.mxu0 0
        %1118 = vmatpush1.bf16.msra.mxu0 0
        %1119 = vmatprep.subr.bf16.mxu0 0
        %1120 = vmatpush1.bf16.msra.mxu0 0
        %1121 = vmatprep.subr.bf16.mxu0 0
        %1122 = vmatpush1.bf16.msra.mxu0 0
        %1123 = vmatprep.subr.bf16.mxu0 0
        %1124 = vmatpush1.bf16.msra.mxu0 0
        %1125 = vmatprep.subr.bf16.mxu0 0
        %1126 = vmatpush1.bf16.msra.mxu0 0
        %1127 = vmatprep.subr.bf16.mxu0 0
        %1128 = vmatpush1.bf16.msra.mxu0 0
        %1129 = vmatprep.subr.bf16.mxu0 0
        %1130 = vmatpush1.bf16.msra.mxu0 0
        %1131 = vmatprep.subr.bf16.mxu0 0
        %1132 = vmatpush1.bf16.msra.mxu0 0
        %1133 = vmatprep.subr.bf16.mxu0 0
        %1134 = vmatpush1.bf16.msra.mxu0 0
        %1135 = vmatprep.subr.bf16.mxu0 0
        %1136 = vmatpush1.bf16.msra.mxu0 0
        %1137 = vmatprep.mubr.bf16.mxu0 0
        %1138 = vmatmul.mubr.bf16.gmra.mrb[0].mxu0 %v1099
        %v1139 = vpop.f32.mrb[0].mxu0
        %v1140 = vadd.f32 0.0, %v1139
        %v1141 = vpop.f32.mrb[0].mxu0
        %v1142 = vpop.f32.mrb[0].mxu0
        %v1143 = vpop.f32.mrb[0].mxu0
        %1144 = vdwg.mxu0
        %v1146 = vsel %vm869, %v1095, 0
        %v1149 = vsel %vm1101, %v856, 0
        %1151 = vmatprep.subr.bf16.mxu0 0
        %1152 = vmatpush1.bf16.msra.mxu0 %v1149
        %1153 = vmatprep.subr.bf16.mxu0 0
        %1154 = vmatpush1.bf16.msra.mxu0 0
        %1155 = vmatprep.subr.bf16.mxu0 0
        %1156 = vmatpush1.bf16.msra.mxu0 0
        %1157 = vmatprep.subr.bf16.mxu0 0
        %1158 = vmatpush1.bf16.msra.mxu0 0
        %1159 = vmatprep.subr.bf16.mxu0 0
        %1160 = vmatpush1.bf16.msra.mxu0 0
        %1161 = vmatprep.subr.bf16.mxu0 0
        %1162 = vmatpush1.bf16.msra.mxu0 0
        %1163 = vmatprep.subr.bf16.mxu0 0
        %1164 = vmatpush1.bf16.msra.mxu0 0
        %1165 = vmatprep.subr.bf16.mxu0 0
        %1166 = vmatpush1.bf16.msra.mxu0 0
        %1167 = vmatprep.subr.bf16.mxu0 0
        %1168 = vmatpush1.bf16.msra.mxu0 0
        %1169 = vmatprep.subr.bf16.mxu0 0
        %1170 = vmatpush1.bf16.msra.mxu0 0
        %1171 = vmatprep.subr.bf16.mxu0 0
        %1172 = vmatpush1.bf16.msra.mxu0 0
        %1173 = vmatprep.subr.bf16.mxu0 0
        %1174 = vmatpush1.bf16.msra.mxu0 0
        %1175 = vmatprep.subr.bf16.mxu0 0
        %1176 = vmatpush1.bf16.msra.mxu0 0
        %1177 = vmatprep.subr.bf16.mxu0 0
        %1178 = vmatpush1.bf16.msra.mxu0 0
        %1179 = vmatprep.subr.bf16.mxu0 0
        %1180 = vmatpush1.bf16.msra.mxu0 0
        %1181 = vmatprep.subr.bf16.mxu0 0
        %1182 = vmatpush1.bf16.msra.mxu0 0
        %1183 = vmatprep.mubr.bf16.mxu0 0
        %1184 = vmatmul.mubr.bf16.gmra.mrb[0].mxu0 %v1146
        %v1185 = vpop.f32.mrb[0].mxu0
        %v1186 = vadd.f32 0.0, %v1185
        %v1187 = vpop.f32.mrb[0].mxu0
        %v1188 = vpop.f32.mrb[0].mxu0
        %v1189 = vpop.f32.mrb[0].mxu0
        %1190 = vdwg.mxu0
        %v1192 = vsel %vm869, %v1096, 0
        %v1195 = vsel %vm1101, %v859, 0
        %1197 = vmatprep.subr.bf16.mxu0 0
        %1198 = vmatpush1.bf16.msra.mxu0 %v1195
        %1199 = vmatprep.subr.bf16.mxu0 0
        %1200 = vmatpush1.bf16.msra.mxu0 0
        %1201 = vmatprep.subr.bf16.mxu0 0
        %1202 = vmatpush1.bf16.msra.mxu0 0
        %1203 = vmatprep.subr.bf16.mxu0 0
        %1204 = vmatpush1.bf16.msra.mxu0 0
        %1205 = vmatprep.subr.bf16.mxu0 0
        %1206 = vmatpush1.bf16.msra.mxu0 0
        %1207 = vmatprep.subr.bf16.mxu0 0
        %1208 = vmatpush1.bf16.msra.mxu0 0
        %1209 = vmatprep.subr.bf16.mxu0 0
        %1210 = vmatpush1.bf16.msra.mxu0 0
        %1211 = vmatprep.subr.bf16.mxu0 0
        %1212 = vmatpush1.bf16.msra.mxu0 0
        %1213 = vmatprep.subr.bf16.mxu0 0
        %1214 = vmatpush1.bf16.msra.mxu0 0
        %1215 = vmatprep.subr.bf16.mxu0 0
        %1216 = vmatpush1.bf16.msra.mxu0 0
        %1217 = vmatprep.subr.bf16.mxu0 0
        %1218 = vmatpush1.bf16.msra.mxu0 0
        %1219 = vmatprep.subr.bf16.mxu0 0
        %1220 = vmatpush1.bf16.msra.mxu0 0
        %1221 = vmatprep.subr.bf16.mxu0 0
        %1222 = vmatpush1.bf16.msra.mxu0 0
        %1223 = vmatprep.subr.bf16.mxu0 0
        %1224 = vmatpush1.bf16.msra.mxu0 0
        %1225 = vmatprep.subr.bf16.mxu0 0
        %1226 = vmatpush1.bf16.msra.mxu0 0
        %1227 = vmatprep.subr.bf16.mxu0 0
        %1228 = vmatpush1.bf16.msra.mxu0 0
        %1229 = vmatprep.mubr.bf16.mxu0 0
        %1230 = vmatmul.mubr.bf16.gmra.mrb[0].mxu0 %v1192
        %v1231 = vpop.f32.mrb[0].mxu0
        %v1232 = vadd.f32 0.0, %v1231
        %v1233 = vpop.f32.mrb[0].mxu0
        %v1234 = vpop.f32.mrb[0].mxu0
        %v1235 = vpop.f32.mrb[0].mxu0
        %1236 = vdwg.mxu0
        %v1238 = vsel %vm869, %v1097, 0
        %v1241 = vsel %vm1101, %v862, 0
        %1243 = vmatprep.subr.bf16.mxu0 0
        %1244 = vmatpush1.bf16.msra.mxu0 %v1241
        %1245 = vmatprep.subr.bf16.mxu0 0
        %1246 = vmatpush1.bf16.msra.mxu0 0
        %1247 = vmatprep.subr.bf16.mxu0 0
        %1248 = vmatpush1.bf16.msra.mxu0 0
        %1249 = vmatprep.subr.bf16.mxu0 0
        %1250 = vmatpush1.bf16.msra.mxu0 0
        %1251 = vmatprep.subr.bf16.mxu0 0
        %1252 = vmatpush1.bf16.msra.mxu0 0
        %1253 = vmatprep.subr.bf16.mxu0 0
        %1254 = vmatpush1.bf16.msra.mxu0 0
        %1255 = vmatprep.subr.bf16.mxu0 0
        %1256 = vmatpush1.bf16.msra.mxu0 0
        %1257 = vmatprep.subr.bf16.mxu0 0
        %1258 = vmatpush1.bf16.msra.mxu0 0
        %1259 = vmatprep.subr.bf16.mxu0 0
        %1260 = vmatpush1.bf16.msra.mxu0 0
        %1261 = vmatprep.subr.bf16.mxu0 0
        %1262 = vmatpush1.bf16.msra.mxu0 0
        %1263 = vmatprep.subr.bf16.mxu0 0
        %1264 = vmatpush1.bf16.msra.mxu0 0
        %1265 = vmatprep.subr.bf16.mxu0 0
        %1266 = vmatpush1.bf16.msra.mxu0 0
        %1267 = vmatprep.subr.bf16.mxu0 0
        %1268 = vmatpush1.bf16.msra.mxu0 0
        %1269 = vmatprep.subr.bf16.mxu0 0
        %1270 = vmatpush1.bf16.msra.mxu0 0
        %1271 = vmatprep.subr.bf16.mxu0 0
        %1272 = vmatpush1.bf16.msra.mxu0 0
        %1273 = vmatprep.subr.bf16.mxu0 0
        %1274 = vmatpush1.bf16.msra.mxu0 0
        %1275 = vmatprep.mubr.bf16.mxu0 0
        %1276 = vmatmul.mubr.bf16.gmra.mrb[0].mxu0 %v1238
        %v1277 = vpop.f32.mrb[0].mxu0
        %v1278 = vadd.f32 0.0, %v1277
        %v1279 = vpop.f32.mrb[0].mxu0
        %v1280 = vpop.f32.mrb[0].mxu0
        %v1281 = vpop.f32.mrb[0].mxu0
        %1282 = vdwg.mxu0
        %v1283 = vmul.f32 %v1140, %v1090
        %v1284 = vmul.f32 %v1186, %v1091
        %v1285 = vmul.f32 %v1232, %v1092
        %v1286 = vmul.f32 %v1278, %v1093
        %v1287 = vpack.c.bf16 %v1283, %v1283
        %v1289 = vunpack.c.l.s4 1983009808
        %v1290 = vunpack.c.0.s8 %v1289
        %v1291 = vlaneseq
        %v1292 = vshrl.u32 %v1291, 7
        %v1293 = vsub.s32 %v1290, %v1292
        %v1294 = vrot.slane %v1287, %v1293
        %v1295 = vpack.c.bf16 %v1285, %v1285
        %v1297 = vunpack.c.l.s4 1983009808
        %v1298 = vunpack.c.0.s8 %v1297
        %v1299 = vlaneseq
        %v1300 = vshrl.u32 %v1299, 7
        %v1301 = vsub.s32 %v1298, %v1300
        %v1302 = vrot.slane %v1295, %v1301
        %v1303 = vcombine.low %v1294, %v1302
        %v1304 = vcombine.high %v1294, %v1302
        %v1306 = vunpack.c.l.s4 1934713408
        %v1307 = vunpack.c.0.s8 %v1306
        %v1308 = vlaneseq
        %v1309 = vshrl.u32 %v1308, 7
        %v1310 = vsub.s32 %v1307, %v1309
        %v1311 = vrot.slane %v1303, %v1310
        %v1313 = vunpack.c.l.s4 1934713408
        %v1314 = vunpack.c.0.s8 %v1313
        %v1315 = vlaneseq
        %v1316 = vshrl.u32 %v1315, 7
        %v1317 = vsub.s32 %v1314, %v1316
        %v1318 = vrot.slane %v1304, %v1317
        %v1319 = vcombine.high %v1311, 0
        %v1320 = vcombine.high %v1318, 0
        %v1321 = vpack.c.bf16 %v1284, %v1284
        %v1323 = vunpack.c.l.s4 1983009808
        %v1324 = vunpack.c.0.s8 %v1323
        %v1325 = vlaneseq
        %v1326 = vshrl.u32 %v1325, 7
        %v1327 = vsub.s32 %v1324, %v1326
        %v1328 = vrot.slane %v1321, %v1327
        %v1329 = vpack.c.bf16 %v1286, %v1286
        %v1331 = vunpack.c.l.s4 1983009808
        %v1332 = vunpack.c.0.s8 %v1331
        %v1333 = vlaneseq
        %v1334 = vshrl.u32 %v1333, 7
        %v1335 = vsub.s32 %v1332, %v1334
        %v1336 = vrot.slane %v1329, %v1335
        %v1337 = vcombine.low %v1328, %v1336
        %v1338 = vcombine.high %v1328, %v1336
        %v1340 = vunpack.c.l.s4 1934713408
        %v1341 = vunpack.c.0.s8 %v1340
        %v1342 = vlaneseq
        %v1343 = vshrl.u32 %v1342, 7
        %v1344 = vsub.s32 %v1341, %v1343
        %v1345 = vrot.slane %v1337, %v1344
        %v1347 = vunpack.c.l.s4 1934713408
        %v1348 = vunpack.c.0.s8 %v1347
        %v1349 = vlaneseq
        %v1350 = vshrl.u32 %v1349, 7
        %v1351 = vsub.s32 %v1348, %v1350
        %v1352 = vrot.slane %v1338, %v1351
        %v1353 = vcombine.high %v1345, 0
        %v1354 = vcombine.high %v1352, 0
        %v1357 = vpack.i.b16 %v1345, %v1311
        %v1359 = vshrl.u32 %v1311, 16
        %v1360 = vshrl.u32 %v1345, 16
        %v1361 = vpack.i.b16 %v1360, %v1359
        %v1365 = vpack.i.b16 %v1353, %v1319
        %v1367 = vshrl.u32 %v1319, 16
        %v1368 = vshrl.u32 %v1353, 16
        %v1369 = vpack.i.b16 %v1368, %v1367
        %v1373 = vpack.i.b16 %v1352, %v1318
        %v1375 = vshrl.u32 %v1318, 16
        %v1376 = vshrl.u32 %v1352, 16
        %v1377 = vpack.i.b16 %v1376, %v1375
        %v1381 = vpack.i.b16 %v1354, %v1320
        %v1383 = vshrl.u32 %v1320, 16
        %v1384 = vshrl.u32 %v1354, 16
        %v1385 = vpack.i.b16 %v1384, %v1383
        %v1387 = vcombine.low %v1357, %v1373
        %v1389 = vunpack.c.l.s4 1983009808
        %v1390 = vunpack.c.0.s8 %v1389
        %v1391 = vlaneseq
        %v1392 = vshrl.u32 %v1391, 7
        %v1393 = vsub.s32 %v1390, %v1392
        %v1394 = vrot.slane %v1387, %v1393
        %v1395 = vcombine.low %v1365, %v1381
        %v1397 = vunpack.c.l.s4 1983009808
        %v1398 = vunpack.c.0.s8 %v1397
        %v1399 = vlaneseq
        %v1400 = vshrl.u32 %v1399, 7
        %v1401 = vsub.s32 %v1398, %v1400
        %v1402 = vrot.slane %v1395, %v1401
        %v1403 = vcombine.low %v1394, %v1402
        %v1405 = vunpack.c.l.s4 1934713408
        %v1406 = vunpack.c.0.s8 %v1405
        %v1407 = vlaneseq
        %v1408 = vshrl.u32 %v1407, 7
        %v1409 = vsub.s32 %v1406, %v1408
        %v1410 = vrot.slane %v1403, %v1409
        %v1411 = vcombine.high %v1410, 0
        %v1412 = vcombine.low %v1361, %v1377
        %v1414 = vunpack.c.l.s4 1983009808
        %v1415 = vunpack.c.0.s8 %v1414
        %v1416 = vlaneseq
        %v1417 = vshrl.u32 %v1416, 7
        %v1418 = vsub.s32 %v1415, %v1417
        %v1419 = vrot.slane %v1412, %v1418
        %v1420 = vcombine.low %v1369, %v1385
        %v1422 = vunpack.c.l.s4 1983009808
        %v1423 = vunpack.c.0.s8 %v1422
        %v1424 = vlaneseq
        %v1425 = vshrl.u32 %v1424, 7
        %v1426 = vsub.s32 %v1423, %v1425
        %v1427 = vrot.slane %v1420, %v1426
        %v1428 = vcombine.low %v1419, %v1427
        %v1430 = vunpack.c.l.s4 1934713408
        %v1431 = vunpack.c.0.s8 %v1430
        %v1432 = vlaneseq
        %v1433 = vshrl.u32 %v1432, 7
        %v1434 = vsub.s32 %v1431, %v1433
        %v1435 = vrot.slane %v1428, %v1434
        %v1436 = vcombine.high %v1435, 0
        %v1439 = vpack.i.b16 %v1435, %v1410
        %v1440 = vshrl.u32 %v1410, 16
        %v1441 = vshrl.u32 %v1435, 16
        %v1442 = vpack.i.b16 %v1441, %v1440
        %v1445 = vpack.i.b16 %v1436, %v1411
        %v1446 = vshrl.u32 %v1411, 16
        %v1447 = vshrl.u32 %v1436, 16
        %v1448 = vpack.i.b16 %v1447, %v1446
        %1449 = vrot.lane.b32.xlu0 %v1442, 8
        %v1450 = vpop.permute.xlu0 %1449
        %1451 = vrot.lane.b32.xlu0 %v1445, 16
        %v1452 = vpop.permute.xlu0 %1451
        %1453 = vrot.lane.b32.xlu0 %v1448, 24
        %v1454 = vpop.permute.xlu0 %1453
        %v1457 = vsel %vm869, %v1439, %v1450
        %vm1458 = vcmask 130048
        %v1460 = vsel %vm1458, %v1457, %v1452
        %vm1461 = vcmask 195584
        %v1463 = vsel %vm1461, %v1460, %v1454
        %v1464 = vld [vmem:[%s4] sm:$0xf]
        %v1465 = vld [vmem:[%s4 + $0x4] sm:$0xf]
        %v1466 = vld [vmem:[%s4 + $0x8] sm:$0xf]
        %v1467 = vld [vmem:[%s4 + $0xc] sm:$0xf]
        %v1472 = vunpack.c.l.b16 %v1464
        %v1473 = vunpack.c.l.b16 %v1465
        %v1474 = vunpack.c.l.b16 %v1466
        %v1475 = vunpack.c.l.b16 %v1467
        %v1476 = vpack.c.b16 %v1473, %v1472
        %v1477 = vpack.c.b16 %v1475, %v1474
        %v1480 = vsel %vm413, %v1463, 0
        %1482 = vmatprep.subr.bf16.mxu0 0
        %1483 = vmatpush1.bf16.msra.mxu0 %v1476
        %1484 = vmatprep.subr.bf16.mxu0 0
        %1485 = vmatpush1.bf16.msra.mxu0 %v1477
        %1486 = vmatprep.subr.bf16.mxu0 0
        %1487 = vmatpush1.bf16.msra.mxu0 0
        %1488 = vmatprep.subr.bf16.mxu0 0
        %1489 = vmatpush1.bf16.msra.mxu0 0
        %1490 = vmatprep.subr.bf16.mxu0 0
        %1491 = vmatpush1.bf16.msra.mxu0 0
        %1492 = vmatprep.subr.bf16.mxu0 0
        %1493 = vmatpush1.bf16.msra.mxu0 0
        %1494 = vmatprep.subr.bf16.mxu0 0
        %1495 = vmatpush1.bf16.msra.mxu0 0
        %1496 = vmatprep.subr.bf16.mxu0 0
        %1497 = vmatpush1.bf16.msra.mxu0 0
        %1498 = vmatprep.subr.bf16.mxu0 0
        %1499 = vmatpush1.bf16.msra.mxu0 0
        %1500 = vmatprep.subr.bf16.mxu0 0
        %1501 = vmatpush1.bf16.msra.mxu0 0
        %1502 = vmatprep.subr.bf16.mxu0 0
        %1503 = vmatpush1.bf16.msra.mxu0 0
        %1504 = vmatprep.subr.bf16.mxu0 0
        %1505 = vmatpush1.bf16.msra.mxu0 0
        %1506 = vmatprep.subr.bf16.mxu0 0
        %1507 = vmatpush1.bf16.msra.mxu0 0
        %1508 = vmatprep.subr.bf16.mxu0 0
        %1509 = vmatpush1.bf16.msra.mxu0 0
        %1510 = vmatprep.subr.bf16.mxu0 0
        %1511 = vmatpush1.bf16.msra.mxu0 0
        %1512 = vmatprep.subr.bf16.mxu0 0
        %1513 = vmatpush1.bf16.msra.mxu0 0
        %1514 = vmatprep.mubr.bf16.mxu0 0
        %1515 = vmatmul.mubr.bf16.gmra.mrb[0].mxu0 %v1480
        %v1516 = vpop.f32.mrb[0].mxu0
        %v1517 = vadd.f32 0.0, %v1516
        %v1518 = vpop.f32.mrb[0].mxu0
        %v1519 = vpop.f32.mrb[0].mxu0
        %v1520 = vpop.f32.mrb[0].mxu0
        %1521 = vdwg.mxu0
        %v1522 = vadd.f32 %v410, %v1517
        %v1523 = vld [vmem:[%s5] sm:$0x1]
        %v1525 = vlaneseq
        %v1526 = vshrl.u32 %v1525, 7
        %v1527 = vsub.s32 0, %v1526
        %v1528 = vrot.slane %v1523, %v1527
        %v1530 = vadd.f32 %v1522, %v1528
        %v1531 = vld [vmem:[%s6] sm:$0x1]
        %v1532 = vld [vmem:[%s7] sm:$0x1]
        %v1533 = vsel %vm413, %v1530, 0.0
        %1534 = vadd.xlane.f32.xlu0 %v1533
        %v1535 = vpop.xlane.xlu0 %1534
        %v1536 = vmul.f32 %v1535, %v417
        %v1537 = vsub.f32 %v1530, %v1536
        %v1538 = vmul.f32 %v1537, %v1537
        %v1539 = vsel %vm413, %v1538, 0.0
        %1540 = vadd.xlane.f32.xlu0 %v1539
        %v1541 = vpop.xlane.xlu0 %1540
        %v1542 = vmul.f32 %v1541, %v417
        %v1543 = vadd.f32 %v1542, 1e-05
        %v1544 = vrsqrt.pop %v1543
        %v1545 = vmul.f32 %v1537, %v1544
        %v1547 = vlaneseq
        %v1548 = vshrl.u32 %v1547, 7
        %v1549 = vsub.s32 0, %v1548
        %v1550 = vrot.slane %v1531, %v1549
        %v1552 = vmul.f32 %v1545, %v1550
        %v1554 = vlaneseq
        %v1555 = vshrl.u32 %v1554, 7
        %v1556 = vsub.s32 0, %v1555
        %v1557 = vrot.slane %v1532, %v1556
        %v1559 = vadd.f32 %v1552, %v1557
        %v1560 = vpack.c.bf16 %v1559, %v1559
        %v1561 = vld [vmem:[%s8] sm:$0xf]
        %v1562 = vld [vmem:[%s8 + $0x4] sm:$0xf]
        %v1563 = vld [vmem:[%s8 + $0x8] sm:$0xf]
        %v1564 = vld [vmem:[%s8 + $0xc] sm:$0xf]
        %v1565 = vld [vmem:[%s9] sm:$0x1]
        %v1567 = vlaneseq
        %v1568 = vshrl.u32 %v1567, 7
        %v1569 = vsub.s32 0, %v1568
        %v1570 = vrot.slane %v1565, %v1569
        %v1576 = vunpack.c.l.b16 %v1561
        %v1577 = vunpack.c.l.b16 %v1562
        %v1578 = vunpack.c.l.b16 %v1563
        %v1579 = vunpack.c.l.b16 %v1564
        %v1580 = vpack.c.b16 %v1577, %v1576
        %v1581 = vpack.c.b16 %v1579, %v1578
        %v1585 = vsel %vm413, %v1560, 0
        %1587 = vmatprep.subr.bf16.mxu0 0
        %1588 = vmatpush1.bf16.msra.mxu0 %v1580
        %1589 = vmatprep.subr.bf16.mxu0 0
        %1590 = vmatpush1.bf16.msra.mxu0 %v1581
        %1591 = vmatprep.subr.bf16.mxu0 0
        %1592 = vmatpush1.bf16.msra.mxu0 0
        %1593 = vmatprep.subr.bf16.mxu0 0
        %1594 = vmatpush1.bf16.msra.mxu0 0
        %1595 = vmatprep.subr.bf16.mxu0 0
        %1596 = vmatpush1.bf16.msra.mxu0 0
        %1597 = vmatprep.subr.bf16.mxu0 0
        %1598 = vmatpush1.bf16.msra.mxu0 0
        %1599 = vmatprep.subr.bf16.mxu0 0
        %1600 = vmatpush1.bf16.msra.mxu0 0
        %1601 = vmatprep.subr.bf16.mxu0 0
        %1602 = vmatpush1.bf16.msra.mxu0 0
        %1603 = vmatprep.subr.bf16.mxu0 0
        %1604 = vmatpush1.bf16.msra.mxu0 0
        %1605 = vmatprep.subr.bf16.mxu0 0
        %1606 = vmatpush1.bf16.msra.mxu0 0
        %1607 = vmatprep.subr.bf16.mxu0 0
        %1608 = vmatpush1.bf16.msra.mxu0 0
        %1609 = vmatprep.subr.bf16.mxu0 0
        %1610 = vmatpush1.bf16.msra.mxu0 0
        %1611 = vmatprep.subr.bf16.mxu0 0
        %1612 = vmatpush1.bf16.msra.mxu0 0
        %1613 = vmatprep.subr.bf16.mxu0 0
        %1614 = vmatpush1.bf16.msra.mxu0 0
        %1615 = vmatprep.subr.bf16.mxu0 0
        %1616 = vmatpush1.bf16.msra.mxu0 0
        %1617 = vmatprep.subr.bf16.mxu0 0
        %1618 = vmatpush1.bf16.msra.mxu0 0
        %1619 = vmatprep.mubr.bf16.mxu0 0
        %1620 = vmatmul.mubr.bf16.gmra.mrb[0].mxu0 %v1585
        %v1621 = vpop.f32.mrb[0].mxu0
        %v1622 = vadd.f32 %v1570, %v1621
        %v1623 = vpop.f32.mrb[0].mxu0
        %v1624 = vpop.f32.mrb[0].mxu0
        %v1625 = vpop.f32.mrb[0].mxu0
        %1626 = vdwg.mxu0
        %v1627 = vmax.f32 %v1622, 0.0
        %v1628 = vpack.c.bf16 %v1627, %v1627
        %v1629 = vld [vmem:[%s10] sm:$0xf]
        %v1630 = vld [vmem:[%s10 + $0x4] sm:$0xf]
        %v1631 = vld [vmem:[%s10 + $0x8] sm:$0xf]
        %v1632 = vld [vmem:[%s10 + $0xc] sm:$0xf]
        %v1633 = vld [vmem:[%s10 + $0x10] sm:$0xf]
        %v1634 = vld [vmem:[%s10 + $0x14] sm:$0xf]
        %v1635 = vld [vmem:[%s10 + $0x18] sm:$0xf]
        %v1636 = vld [vmem:[%s10 + $0x1c] sm:$0xf]
        %v1637 = vld [vmem:[%s10 + $0x20] sm:$0xf]
        %v1638 = vld [vmem:[%s10 + $0x24] sm:$0xf]
        %v1639 = vld [vmem:[%s10 + $0x28] sm:$0xf]
        %v1640 = vld [vmem:[%s10 + $0x2c] sm:$0xf]
        %v1641 = vld [vmem:[%s10 + $0x30] sm:$0xf]
        %v1642 = vld [vmem:[%s10 + $0x34] sm:$0xf]
        %v1643 = vld [vmem:[%s10 + $0x38] sm:$0xf]
        %v1644 = vld [vmem:[%s10 + $0x3c] sm:$0xf]
        %v1645 = vld [vmem:[%s11] sm:$0x1]
        %v1647 = vlaneseq
        %v1648 = vshrl.u32 %v1647, 7
        %v1649 = vsub.s32 0, %v1648
        %v1650 = vrot.slane %v1645, %v1649
        %v1668 = vunpack.c.l.b16 %v1629
        %v1669 = vunpack.c.l.b16 %v1630
        %v1670 = vunpack.c.l.b16 %v1631
        %v1671 = vunpack.c.l.b16 %v1632
        %v1672 = vunpack.c.l.b16 %v1633
        %v1673 = vunpack.c.l.b16 %v1634
        %v1674 = vunpack.c.l.b16 %v1635
        %v1675 = vunpack.c.l.b16 %v1636
        %v1676 = vunpack.c.l.b16 %v1637
        %v1677 = vunpack.c.l.b16 %v1638
        %v1678 = vunpack.c.l.b16 %v1639
        %v1679 = vunpack.c.l.b16 %v1640
        %v1680 = vunpack.c.l.b16 %v1641
        %v1681 = vunpack.c.l.b16 %v1642
        %v1682 = vunpack.c.l.b16 %v1643
        %v1683 = vunpack.c.l.b16 %v1644
        %v1684 = vpack.c.b16 %v1669, %v1668
        %v1685 = vpack.c.b16 %v1671, %v1670
        %v1686 = vpack.c.b16 %v1673, %v1672
        %v1687 = vpack.c.b16 %v1675, %v1674
        %v1688 = vpack.c.b16 %v1677, %v1676
        %v1689 = vpack.c.b16 %v1679, %v1678
        %v1690 = vpack.c.b16 %v1681, %v1680
        %v1691 = vpack.c.b16 %v1683, %v1682
        %1700 = vmatprep.subr.bf16.mxu0 0
        %1701 = vmatpush1.bf16.msra.mxu0 %v1684
        %1702 = vmatprep.subr.bf16.mxu0 0
        %1703 = vmatpush1.bf16.msra.mxu0 %v1685
        %1704 = vmatprep.subr.bf16.mxu0 0
        %1705 = vmatpush1.bf16.msra.mxu0 %v1686
        %1706 = vmatprep.subr.bf16.mxu0 0
        %1707 = vmatpush1.bf16.msra.mxu0 %v1687
        %1708 = vmatprep.subr.bf16.mxu0 0
        %1709 = vmatpush1.bf16.msra.mxu0 %v1688
        %1710 = vmatprep.subr.bf16.mxu0 0
        %1711 = vmatpush1.bf16.msra.mxu0 %v1689
        %1712 = vmatprep.subr.bf16.mxu0 0
        %1713 = vmatpush1.bf16.msra.mxu0 %v1690
        %1714 = vmatprep.subr.bf16.mxu0 0
        %1715 = vmatpush1.bf16.msra.mxu0 %v1691
        %1716 = vmatprep.subr.bf16.mxu0 0
        %1717 = vmatpush1.bf16.msra.mxu0 0
        %1718 = vmatprep.subr.bf16.mxu0 0
        %1719 = vmatpush1.bf16.msra.mxu0 0
        %1720 = vmatprep.subr.bf16.mxu0 0
        %1721 = vmatpush1.bf16.msra.mxu0 0
        %1722 = vmatprep.subr.bf16.mxu0 0
        %1723 = vmatpush1.bf16.msra.mxu0 0
        %1724 = vmatprep.subr.bf16.mxu0 0
        %1725 = vmatpush1.bf16.msra.mxu0 0
        %1726 = vmatprep.subr.bf16.mxu0 0
        %1727 = vmatpush1.bf16.msra.mxu0 0
        %1728 = vmatprep.subr.bf16.mxu0 0
        %1729 = vmatpush1.bf16.msra.mxu0 0
        %1730 = vmatprep.subr.bf16.mxu0 0
        %1731 = vmatpush1.bf16.msra.mxu0 0
        %1732 = vmatprep.mubr.bf16.mxu0 0
        %1733 = vmatmul.mubr.bf16.gmra.mrb[0].mxu0 %v1628
        %v1734 = vpop.f32.mrb[0].mxu0
        %v1735 = vadd.f32 %v1650, %v1734
        %v1736 = vpop.f32.mrb[0].mxu0
        %v1737 = vpop.f32.mrb[0].mxu0
        %v1738 = vpop.f32.mrb[0].mxu0
        %1739 = vdwg.mxu0
        %v1740 = vmax.f32 %v1735, 0.0
        %v1741 = vadd.f32 %v1530, %v1740
        %1742 = vst.msk [vmem:[%s404] sm:$0xff] %vm413, %v1741
        %s1743 = sand.u32 %s291, 1
        %s1744 = scalar_lea.sflag [#allocation4], %s1743
        %s1745 = sand.u32 %s291, 1
        %s1746 = smul.addr %s1745, 8
        %s1747 = scalar_lea.vmem [#allocation3], %s1746
        // Predicated region
        $region69: #{tpu_custom_call.1} parent=67 // pred_check
          %p1748 = pneg %p301
        $region70: #{tpu_custom_call.1} parent=67 // pred_check_branch
          %1750 = sbr.rel (%p1748) target = $region72
        $region71: #{tpu_custom_call.1} parent=67 // pred_region
          %s1752 = ssub.s32 128, 128
          %1753 = vsyncadd %s1744, %s1752
          %s1754 = smul.addr %s26, 128
          %s1755 = scalar_lea.hbm %s12, %s1754
          %s1757 = sshll.u32 %s1747, 4
          %s1758 = int_to_ptr.vmem [resolvable:$true] %s1757
          %1760 = dma.vmem_to_hbm [thread:$0]  %s1758, 128, %s1755, %s1744
        $region72: #{tpu_custom_call.1} parent=67 // pred_fallthru
          _
      $region68: #{tpu_custom_call.1} parent=5 // pred_fallthru
        _
      %p1761 = scmp.le.s32.totalorder 2, %s21
      // Predicated region
      $region73: #{tpu_custom_call.1} parent=5 // pred_check
        %p1762 = pneg %p1761
      $region74: #{tpu_custom_call.1} parent=5 // pred_check_branch
        %1764 = sbr.rel (%p1762) target = $region76
      $region75: #{tpu_custom_call.1} parent=5 // pred_region
        %s1765 = ssub.s32 %s21, 2
        // Predicated region
        $region77: #{tpu_custom_call.1} parent=75 // pred_check
          %p1766 = pneg %p307
        $region78: #{tpu_custom_call.1} parent=75 // pred_check_branch
          %1768 = sbr.rel (%p1766) target = $region80
        $region79: #{tpu_custom_call.1} parent=75 // pred_region
          %s1769 = sand.u32 %s292, 1
          %s1770 = scalar_lea.sflag [#allocation4], %s1769
          %s1771 = sand.u32 %s292, 1
          %s1772 = smul.addr %s1771, 8
          %s1773 = scalar_lea.vmem [#allocation3], %s1772
          %1774 = dma.done %s1770, 128
        $region80: #{tpu_custom_call.1} parent=75 // pred_fallthru
          _
      $region76: #{tpu_custom_call.1} parent=5 // pred_fallthru
        _
    $region6: #{tpu_custom_call.1} parent=1 // loop_footer
      %s25 = sadd.s32 1, %s21
    $region7: #{tpu_custom_call.1} parent=1 // loop_footer_branch
      %20 = sbr.rel target = $region3
    $region8: #{tpu_custom_call.1} parent=1 // loop_exit
      _
    %1775 = vsyncpa [#allocation4], 1
    %s1776 = scalar_lea.sflag [#allocation4], 1
    %1777 = vsyncpa %s1776, 1

</llo_original>
